<compile_context>
chip_gen: v6e
topology: v6e:2x2x1
jax: 0.10.0
libtpu: 0.0.40
codegen_flags: <defaults>
</compile_context>

<pallas_src>
import functools
import math

import jax
import jax.numpy as jnp
from jax import lax
from jax.experimental import pallas as pl
from jax.experimental.pallas import tpu as pltpu

EPS = 1e-5
ASPP_RATES = (1, 6, 12, 18)

FUSED_M_MAX = 1024   # whole-M-resident fused-BN path when M <= this
TM_TILED = 256       # M tile for the two-pass (tiled) path


def _round_up(x, m):
    return (x + m - 1) // m * m


def _vmem_cap_bytes():
    try:
        return int(pltpu.get_tpu_info().vmem_capacity_bytes)
    except Exception:
        return 64 * 2 ** 20


VMEM_CAP = _vmem_cap_bytes()


def _vmem_limit(need_bytes):
    return int(min(int(0.85 * VMEM_CAP),
                   max(2 * need_bytes + (4 << 20), 32 << 20)))


def _plan_k(Kp, TM, TN):
    """Pick (tk, num_k) with tk * num_k == Kp (Kp a multiple of 128), sized so
    the double-buffered bf16 A and W streams fit a VMEM budget derived from the
    chip's capacity.  At small M this collapses long reductions into 1-2 steps."""
    budget = max(8 << 20, VMEM_CAP // 4)
    per_unit = 4 * (TM + TN) * 128      # bytes per 128 K-elements (2 bufs, bf16)
    cap_units = max(1, budget // per_unit)
    units = Kp // 128
    if units <= cap_units:
        return Kp, 1
    num_k = units
    for d in range(2, units + 1):
        if units % d == 0 and units // d <= cap_units:
            num_k = d
            break
    return (units // num_k) * 128, num_k


# ----------------------------------------------------------------------------
# Conv parameter container: pre-transposed / pre-padded / pre-cast weights
# (pytree with static metadata so it passes through jit boundaries).
# ----------------------------------------------------------------------------
@jax.tree_util.register_pytree_node_class
class ConvP:
    def __init__(self, w, beta, kh, kw, cin, cout):
        self.w = w          # (Kp, Np) bf16 matmul operand
        self.beta = beta    # (1, Np) f32 fused bias (zeros for BN convs)
        self.kh, self.kw, self.cin, self.cout = kh, kw, cin, cout

    def tree_flatten(self):
        return (self.w, self.beta), (self.kh, self.kw, self.cin, self.cout)

    @classmethod
    def tree_unflatten(cls, aux, children):
        return cls(children[0], children[1], *aux)


# ----------------------------------------------------------------------------
# Kernel bodies
# ----------------------------------------------------------------------------
def _epilogue(y, b, r, o_ref, *, bn, relu, inv_m):
    """y: f32 (TM, TN) accumulator.  Whole-M batch-stat BN (only valid when the
    full M is resident), bias/beta, residual, ReLU, bf16 store."""
    if bn:
        mean = jnp.sum(y, axis=0, keepdims=True) * inv_m
        ex2 = jnp.sum(y * y, axis=0, keepdims=True) * inv_m
        var = jnp.maximum(ex2 - mean * mean, 0.0)
        y = (y - mean) * lax.rsqrt(var + EPS)
    y = y + b
    if r is not None:
        y = y + r.astype(jnp.float32)
    if relu:
        y = jnp.maximum(y, 0.0)
    o_ref[...] = y.astype(o_ref.dtype)


def _make_mm_kernel(*, bn, relu, has_res, with_acc, m_rows):
    inv_m = 1.0 / float(m_rows)

    if with_acc:
        def kernel(*refs):
            if has_res:
                a_ref, w_ref, b_ref, r_ref, o_ref, acc_ref = refs
            else:
                a_ref, w_ref, b_ref, o_ref, acc_ref = refs
                r_ref = None
            k = pl.program_id(2)

            @pl.when(k == 0)
            def _():
                acc_ref[...] = jnp.zeros_like(acc_ref)

            acc_ref[...] += jnp.dot(a_ref[...], w_ref[...],
                                    preferred_element_type=jnp.float32)

            @pl.when(k == pl.num_programs(2) - 1)
            def _():
                _epilogue(acc_ref[...], b_ref[...],
                          r_ref[...] if has_res else None, o_ref,
                          bn=bn, relu=relu, inv_m=inv_m)
    else:
        # num_k == 1: no accumulator scratch, no zero-fill, no pl.when gating.
        def kernel(*refs):
            if has_res:
                a_ref, w_ref, b_ref, r_ref, o_ref = refs
            else:
                a_ref, w_ref, b_ref, o_ref = refs
                r_ref = None
            y = jnp.dot(a_ref[...], w_ref[...],
                        preferred_element_type=jnp.float32)
            _epilogue(y, b_ref[...], r_ref[...] if has_res else None, o_ref,
                      bn=bn, relu=relu, inv_m=inv_m)

    return kernel


def _make_mm_stats_kernel(with_acc):
    """Tiled matmul emitting the pre-BN activation (bf16) plus per-(M-tile)
    column sum / sum-of-squares (f32) for the two-pass BN."""
    def write_out(y, y_ref, s_ref):
        y_ref[...] = y.astype(y_ref.dtype)
        s = jnp.sum(y, axis=0, keepdims=True)
        ss = jnp.sum(y * y, axis=0, keepdims=True)
        s_ref[...] = jnp.concatenate([s, ss], axis=0)[None]

    if with_acc:
        def kernel(a_ref, w_ref, y_ref, s_ref, acc_ref):
            k = pl.program_id(2)

            @pl.when(k == 0)
            def _():
                acc_ref[...] = jnp.zeros_like(acc_ref)

            acc_ref[...] += jnp.dot(a_ref[...], w_ref[...],
                                    preferred_element_type=jnp.float32)

            @pl.when(k == pl.num_programs(2) - 1)
            def _():
                write_out(acc_ref[...], y_ref, s_ref)
    else:
        def kernel(a_ref, w_ref, y_ref, s_ref):
            write_out(jnp.dot(a_ref[...], w_ref[...],
                              preferred_element_type=jnp.float32),
                      y_ref, s_ref)
    return kernel


def _make_bn_apply_kernel(relu, has_res):
    def kernel(*refs):
        if has_res:
            y_ref, sc_ref, sh_ref, r_ref, o_ref = refs
        else:
            y_ref, sc_ref, sh_ref, o_ref = refs
            r_ref = None
        y = y_ref[...].astype(jnp.float32) * sc_ref[...] + sh_ref[...]
        if has_res:
            y = y + r_ref[...].astype(jnp.float32)
        if relu:
            y = jnp.maximum(y, 0.0)
        o_ref[...] = y.astype(o_ref.dtype)
    return kernel


# ----------------------------------------------------------------------------
# pallas_call builders
# ----------------------------------------------------------------------------
def _conv_matmul(a_p, w, b, res_p, *, bn, relu, TM, TN, tk, m_rows):
    Mp, Kp = a_p.shape
    _, Np = w.shape
    num_m, num_n, num_k = Mp // TM, Np // TN, Kp // tk
    has_res = res_p is not None
    with_acc = num_k > 1
    assert (not bn) or num_m == 1  # whole-M BN requires a single M tile

    in_specs = [pl.BlockSpec((TM, tk), lambda m, n, k: (m, k)),
                pl.BlockSpec((tk, TN), lambda m, n, k: (k, n)),
                pl.BlockSpec((1, TN), lambda m, n, k: (0, n))]
    inputs = [a_p, w, b]
    if has_res:
        in_specs.append(pl.BlockSpec((TM, TN), lambda m, n, k: (m, n)))
        inputs.append(res_p)

    scratch = [pltpu.VMEM((TM, TN), jnp.float32)] if with_acc else []
    need = (4 * TM * tk + 4 * tk * TN + 8 * TN + 4 * TM * TN
            + (4 * TM * TN if with_acc else 0)
            + (4 * TM * TN if has_res else 0))

    return pl.pallas_call(
        _make_mm_kernel(bn=bn, relu=relu, has_res=has_res,
                        with_acc=with_acc, m_rows=m_rows),
        out_shape=jax.ShapeDtypeStruct((Mp, Np), jnp.bfloat16),
        grid_spec=pltpu.PrefetchScalarGridSpec(
            num_scalar_prefetch=0,
            grid=(num_m, num_n, num_k),
            in_specs=in_specs,
            out_specs=pl.BlockSpec((TM, TN), lambda m, n, k: (m, n)),
            scratch_shapes=scratch),
        compiler_params=pltpu.CompilerParams(
            dimension_semantics=("parallel", "parallel", "arbitrary"),
            vmem_limit_bytes=_vmem_limit(need)),
    )(*inputs)


def _conv_matmul_stats(a_p, w, *, TM, TN, tk):
    Mp, Kp = a_p.shape
    _, Np = w.shape
    num_m, num_n, num_k = Mp // TM, Np // TN, Kp // tk
    with_acc = num_k > 1
    scratch = [pltpu.VMEM((TM, TN), jnp.float32)] if with_acc else []
    need = (4 * TM * tk + 4 * tk * TN + 4 * TM * TN + 16 * TN
            + (4 * TM * TN if with_acc else 0))
    return pl.pallas_call(
        _make_mm_stats_kernel(with_acc),
        out_shape=(jax.ShapeDtypeStruct((Mp, Np), jnp.bfloat16),
                   jax.ShapeDtypeStruct((num_m, 2, Np), jnp.float32)),
        grid_spec=pltpu.PrefetchScalarGridSpec(
            num_scalar_prefetch=0,
            grid=(num_m, num_n, num_k),
            in_specs=[pl.BlockSpec((TM, tk), lambda m, n, k: (m, k)),
                      pl.BlockSpec((tk, TN), lambda m, n, k: (k, n))],
            out_specs=[pl.BlockSpec((TM, TN), lambda m, n, k: (m, n)),
                       pl.BlockSpec((1, 2, TN), lambda m, n, k: (m, 0, n))],
            scratch_shapes=scratch),
        compiler_params=pltpu.CompilerParams(
            dimension_semantics=("parallel", "parallel", "arbitrary"),
            vmem_limit_bytes=_vmem_limit(need)),
    )(a_p, w)


def _bn_apply(y, scale, shift, res_p, *, relu, TN):
    Mp, Np = y.shape
    TM = 512 if Mp % 512 == 0 else TM_TILED
    num_m, num_n = Mp // TM, Np // TN
    has_res = res_p is not None
    in_specs = [pl.BlockSpec((TM, TN), lambda m, n: (m, n)),
                pl.BlockSpec((1, TN), lambda m, n: (0, n)),
                pl.BlockSpec((1, TN), lambda m, n: (0, n))]
    inputs = [y, scale, shift]
    if has_res:
        in_specs.append(pl.BlockSpec((TM, TN), lambda m, n: (m, n)))
        inputs.append(res_p)
    need = 4 * TM * TN * (2 + (1 if has_res else 0)) + 16 * TN
    return pl.pallas_call(
        _make_bn_apply_kernel(relu, has_res),
        out_shape=jax.ShapeDtypeStruct((Mp, Np), jnp.bfloat16),
        grid_spec=pltpu.PrefetchScalarGridSpec(
            num_scalar_prefetch=0,
            grid=(num_m, num_n),
            in_specs=in_specs,
            out_specs=pl.BlockSpec((TM, TN), lambda m, n: (m, n))),
        compiler_params=pltpu.CompilerParams(
            dimension_semantics=("parallel", "parallel"),
            vmem_limit_bytes=_vmem_limit(need)),
    )(*inputs)


# ----------------------------------------------------------------------------
# Dispatcher: conv-as-matmul with fused BN / bias / residual / ReLU
# ----------------------------------------------------------------------------
def conv_matmul(a, cp, *, bn, relu, residual=None):
    """a: [M, K] im2col patches.  Returns [M, cout] bfloat16."""
    M, K = a.shape
    Kp, Np = cp.w.shape
    N = cp.cout
    assert K == cp.kh * cp.kw * cp.cin
    TN = min(Np, 512)
    has_res = residual is not None

    if bn and M > FUSED_M_MAX:
        # Two-pass batch-stat BN: tiled matmul + per-tile stats, JAX reduction
        # over tiles, then an elementwise normalize/residual/ReLU kernel.
        TM = TM_TILED
        Mp = _round_up(M, TM)
        tk, _ = _plan_k(Kp, TM, TN)
        a_p = jnp.pad(a.astype(jnp.bfloat16), ((0, Mp - M), (0, Kp - K)))
        y, stats = _conv_matmul_stats(a_p, cp.w, TM=TM, TN=TN, tk=tk)
        tot = jnp.sum(stats, axis=0)                       # (2, Np) f32
        mean = tot[0] * (1.0 / M)
        # TODO(synk): E[x^2]-E[x]^2 can cancel for non-fresh checkpoints;
        #             switch to Chan/Welford tile combination if needed.
        var = jnp.maximum(tot[1] * (1.0 / M) - mean * mean, 0.0)
        scale = lax.rsqrt(var + EPS).reshape(1, Np)        # gamma == 1
        shift = cp.beta - mean.reshape(1, Np) * scale
        res_p = None
        if has_res:
            res_p = jnp.pad(residual.astype(jnp.bfloat16),
                            ((0, Mp - M), (0, Np - N)))
        out = _bn_apply(y, scale, shift, res_p, relu=relu, TN=TN)
    else:
        # Single fused kernel (whole-M resident when bn=True).
        if M > FUSED_M_MAX:          # non-BN convs (gp / fc2) at large M
            TM = TM_TILED
            Mp = _round_up(M, TM)
        else:
            Mp = _round_up(M, 8)
            TM = Mp
        tk, _ = _plan_k(Kp, TM, TN)
        a_p = jnp.pad(a.astype(jnp.bfloat16), ((0, Mp - M), (0, Kp - K)))
        res_p = None
        if has_res:
            res_p = jnp.pad(residual.astype(jnp.bfloat16),
                            ((0, Mp - M), (0, Np - N)))
        out = _conv_matmul(a_p, cp.w, cp.beta, res_p,
                           bn=bn, relu=relu, TM=TM, TN=TN, tk=tk, m_rows=M)
    return out[:M, :N]


# ----------------------------------------------------------------------------
# Conv2d wrapper (NHWC bf16 activations)
# ----------------------------------------------------------------------------
def conv2d(x, cp, *, stride=1, dilation=1, padding=0,
           bn=False, relu=False, residual=None):
    Nb, H, W_, Cin = x.shape
    kh, kw = cp.kh, cp.kw
    assert Cin == cp.cin

    out_h = (H + 2 * padding - dilation * (kh - 1) - 1) // stride + 1
    out_w = (W_ + 2 * padding - dilation * (kw - 1) - 1) // stride + 1

    xp = x
    if padding > 0:
        xp = jnp.pad(x, ((0, 0), (padding, padding), (padding, padding), (0, 0)))

    # TODO(synk): im2col materialized by XLA (reads the activation kh*kw times
    # through HBM for 3x3 convs); fold the taps into the kernel to remove it.
    cols = []
    for i in range(kh):
        for j in range(kw):
            cols.append(
                xp[:, i * dilation: i * dilation + stride * (out_h - 1) + 1: stride,
                      j * dilation: j * dilation + stride * (out_w - 1) + 1: stride, :])
    patches = cols[0] if len(cols) == 1 else jnp.concatenate(cols, axis=-1)
    A = patches.reshape(Nb * out_h * out_w, kh * kw * Cin)

    res2d = None
    if residual is not None:
        res2d = residual.reshape(Nb * out_h * out_w, cp.cout)

    out = conv_matmul(A, cp, bn=bn, relu=relu, residual=res2d)
    return out.reshape(Nb, out_h, out_w, cp.cout)


# ----------------------------------------------------------------------------
# Plain-JAX glue ops (small: pooling / interpolation)
# ----------------------------------------------------------------------------
def maxpool_3x3_s2_p1(x):
    Nb, H, W_, C = x.shape
    out_h = (H + 2 - 3) // 2 + 1
    out_w = (W_ + 2 - 3) // 2 + 1
    xp = jnp.pad(x, ((0, 0), (1, 1), (1, 1), (0, 0)), constant_values=-jnp.inf)
    pieces = []
    for i in range(3):
        for j in range(3):
            pieces.append(xp[:, i: i + 2 * (out_h - 1) + 1: 2,
                                j: j + 2 * (out_w - 1) + 1: 2, :])
    return functools.reduce(jnp.maximum, pieces)


def bilinear_upsample_align_corners(x, out_h, out_w):
    Nb, H, W_, C = x.shape
    ys = jnp.linspace(0.0, float(H - 1), out_h) if H > 1 else jnp.zeros((out_h,))
    xs = jnp.linspace(0.0, float(W_ - 1), out_w) if W_ > 1 else jnp.zeros((out_w,))
    y0 = jnp.clip(jnp.floor(ys).astype(jnp.int32), 0, H - 1)
    y1 = jnp.clip(y0 + 1, 0, H - 1)
    wy = ys - y0.astype(jnp.float32)
    x0 = jnp.clip(jnp.floor(xs).astype(jnp.int32), 0, W_ - 1)
    x1 = jnp.clip(x0 + 1, 0, W_ - 1)
    wx = xs - x0.astype(jnp.float32)

    r0 = jnp.take(x, y0, axis=1)
    r1 = jnp.take(x, y1, axis=1)
    r = r0 * (1.0 - wy)[None, :, None, None] + r1 * wy[None, :, None, None]
    c0 = jnp.take(r, x0, axis=2)
    c1 = jnp.take(r, x1, axis=2)
    return c0 * (1.0 - wx)[None, None, :, None] + c1 * wx[None, None, :, None]


# ----------------------------------------------------------------------------
# Parameter initialization (deterministic, in-script), with weights
# pre-transposed / padded / cast once.
# ----------------------------------------------------------------------------
class KeyGen:
    def __init__(self, key):
        self.key = key
        self.i = 0

    def __call__(self):
        self.i += 1
        return jax.random.fold_in(self.key, self.i)


def conv_weight(key, cout, cin, kh, kw):
    fan_in = cin * kh * kw
    std = math.sqrt(2.0 / fan_in)  # kaiming_normal_
    return jax.random.normal(key, (cout, cin, kh, kw), jnp.float32) * std


def bias_init(key, cout, fan_in):
    bound = 1.0 / math.sqrt(fan_in)
    return jax.random.uniform(key, (cout,), jnp.float32, -bound, bound)


def make_conv(key, cout, cin, kh, kw, bias_key=None):
    w = conv_weight(key, cout, cin, kh, kw)           # OIHW f32
    K = kh * kw * cin
    Kp = _round_up(K, 128)
    Np = _round_up(cout, 128)
    wm = jnp.transpose(w, (2, 3, 1, 0)).reshape(K, cout)
    wp = jnp.pad(wm, ((0, Kp - K), (0, Np - cout))).astype(jnp.bfloat16)
    if bias_key is not None:
        b = bias_init(bias_key, cout, K)
    else:
        b = jnp.zeros((cout,), jnp.float32)           # BN beta init = 0
    bp = jnp.pad(b, (0, Np - cout)).reshape(1, Np).astype(jnp.float32)
    return ConvP(wp, bp, kh, kw, cin, cout)


def init_bottleneck(kg, inplanes, planes, downsample):
    p = {
        "w1": make_conv(kg(), planes, inplanes, 1, 1),
        "w2": make_conv(kg(), planes, planes, 3, 3),
        "w3": make_conv(kg(), 4 * planes, planes, 1, 1),
    }
    if downsample:
        p["wd"] = make_conv(kg(), 4 * planes, inplanes, 1, 1)
    return p


def init_layer(kg, inplanes, planes, nblocks):
    blocks = [init_bottleneck(kg, inplanes, planes, True)]
    for _ in range(1, nblocks):
        blocks.append(init_bottleneck(kg, 4 * planes, planes, False))
    return blocks


def init_deeplabv3(key, num_classes):
    kg = KeyGen(key)
    p = {}
    p["conv1"] = make_conv(kg(), 64, 3, 7, 7)
    p["layer1"] = init_layer(kg, 64, 64, 3)
    p["layer2"] = init_layer(kg, 256, 128, 4)
    p["layer3"] = init_layer(kg, 512, 256, 23)
    p["layer4"] = init_layer(kg, 1024, 512, 3)        # MG unit, rates [2,4,8]
    # ASPP conv biases cancel under batch-stat BN -> omitted.
    p["aspp"] = [make_conv(kg(), 256, 2048, 3, 3) for _ in range(4)]
    p["gp"] = make_conv(kg(), 256, 2048, 1, 1, bias_key=kg())
    p["fc1"] = make_conv(kg(), 256, 1280, 1, 1)       # bias cancels under BN
    p["fc2"] = make_conv(kg(), num_classes, 256, 1, 1, bias_key=kg())
    return p


# ----------------------------------------------------------------------------
# Forward pass (jitted at stem / bottleneck / head granularity so the 23
# identical layer3 blocks reuse one compilation and all glue ops fuse)
# ----------------------------------------------------------------------------
@functools.partial(jax.jit, static_argnames=("stride", "rate"))
def bottleneck_fwd(x, p, *, stride, rate):
    out = conv2d(x, p["w1"], bn=True, relu=True)
    out = conv2d(out, p["w2"], stride=stride, dilation=rate, padding=rate,
                 bn=True, relu=True)
    if "wd" in p:
        res = conv2d(x, p["wd"], stride=stride, bn=True, relu=False)
    else:
        res = x
    # conv3 + BN + residual add + ReLU fused
    out = conv2d(out, p["w3"], bn=True, relu=True, residual=res)
    return out


def run_layer(x, blocks, first_stride, rates):
    for idx, blk in enumerate(blocks):
        stride = first_stride if idx == 0 else 1
        x = bottleneck_fwd(x, blk, stride=stride, rate=rates[idx])
    return x


@jax.jit
def stem_fwd(x_nchw, conv1_p):
    x = jnp.transpose(x_nchw, (0, 2, 3, 1)).astype(jnp.bfloat16)   # NCHW -> NHWC
    x = conv2d(x, conv1_p, stride=2, padding=3, bn=True, relu=True)
    return maxpool_3x3_s2_p1(x)


@jax.jit
def head_fwd(x_res, aspp_ps, gp_p, fc1_p, fc2_p):
    # ASPP: conv(3x3, dil=r) + BN (conv bias cancels under batch-stat BN)
    branches = [conv2d(x_res, cp, dilation=r, padding=r, bn=True, relu=False)
                for r, cp in zip(ASPP_RATES, aspp_ps)]

    # global pool branch: AdaptiveAvgPool2d(1) -> 1x1 conv (with bias)
    pooled = jnp.mean(x_res.astype(jnp.float32), axis=(1, 2), keepdims=True)
    x5 = conv2d(pooled, gp_p, bn=False, relu=False)
    h, w = branches[0].shape[1], branches[0].shape[2]
    x5 = jnp.broadcast_to(x5, (x5.shape[0], h, w, x5.shape[3]))    # nearest 1x1->hxw

    score = jnp.concatenate(branches + [x5], axis=-1)              # [N,h,w,1280]

    out1 = conv2d(score, fc1_p, bn=True, relu=False)               # fc1: conv+BN
    out = conv2d(out1, fc2_p, bn=False, relu=False)

    out = bilinear_upsample_align_corners(out.astype(jnp.float32), h * 16, w * 16)
    return jnp.transpose(out, (0, 3, 1, 2))                        # NHWC -> NCHW


def deeplabv3_forward(x_nchw, p):
    x = stem_fwd(x_nchw, p["conv1"])
    x = run_layer(x, p["layer1"], 1, [1] * 3)
    x = run_layer(x, p["layer2"], 2, [1] * 4)
    x = run_layer(x, p["layer3"], 2, [1] * 23)
    x = run_layer(x, p["layer4"], 1, [2, 4, 8])
    return head_fwd(x, p["aspp"], p["gp"], p["fc1"], p["fc2"])


# ----------------------------------------------------------------------------
if __name__ == "__main__":
    NUM_CLASSES = 21
    key = jax.random.PRNGKey(0)
    params = init_deeplabv3(key, NUM_CLASSES)

    x = jax.random.normal(jax.random.fold_in(key, 9999), (2, 3, 64, 64), jnp.float32)

    out = deeplabv3_forward(x, params)
    out = jax.block_until_ready(out)

    assert out.shape == (2, NUM_CLASSES, 64, 64), out.shape
    assert bool(jnp.isfinite(out).all())
    print("KERNEL_OK")
</pallas_src>

<mosaic_0001>
module attributes {stable_mosaic.version = 11 : i64} {
  func.func @kernel(%arg0: i32, %arg1: i32, %arg2: i32, %arg3: memref<256x256xbf16, #tpu.memory_space<vmem>>, %arg4: memref<256x128xbf16, #tpu.memory_space<vmem>>, %arg5: memref<256x128xbf16, #tpu.memory_space<vmem>>, %arg6: memref<1x2x128xf32, #tpu.memory_space<vmem>>) attributes {dimension_semantics = [#tpu.dimension_semantics<parallel>, #tpu.dimension_semantics<parallel>, #tpu.dimension_semantics<arbitrary>], iteration_bounds = array<i64: 8, 1, 1>, scalar_prefetch = 0 : i64, scratch_operands = 0 : i64, tpu.core_type = #tpu.core_type<tc>, window_params = [{transform_indices = @transform_0, window_bounds = array<i64: 256, 256>}, {transform_indices = @transform_1, window_bounds = array<i64: 256, 128>}, {transform_indices = @transform_2, window_bounds = array<i64: 256, 128>}, {transform_indices = @transform_3, window_bounds = array<i64: 1, 2, 128>}]} {
    %c0 = arith.constant 0 : index
    %c0_0 = arith.constant 0 : index
    %0 = vector.load %arg3[%c0, %c0_0] : memref<256x256xbf16, #tpu.memory_space<vmem>>, vector<256x256xbf16>
    %c0_1 = arith.constant 0 : index
    %c0_2 = arith.constant 0 : index
    %1 = vector.load %arg4[%c0_1, %c0_2] : memref<256x128xbf16, #tpu.memory_space<vmem>>, vector<256x128xbf16>
    %cst = arith.constant dense<0.000000e+00> : vector<256x128xf32>
    %2 = tpu.matmul %0, %1, %cst {dimension_numbers = #tpu.dot_dimension_numbers<[1], [0], [0], [1], [0, 0, 1, 1], [], []>} : vector<256x256xbf16>, vector<256x128xbf16>, vector<256x128xf32> -> vector<256x128xf32>
    %3 = arith.truncf %2 : vector<256x128xf32> to vector<256x128xbf16>
    %c0_3 = arith.constant 0 : index
    %c0_4 = arith.constant 0 : index
    %4 = vector.load %arg5[%c0_3, %c0_4] : memref<256x128xbf16, #tpu.memory_space<vmem>>, vector<256x128xbf16>
    tpu.vector_store %arg5[%c0_3, %c0_4], %3 {strides = array<i32>} : memref<256x128xbf16, #tpu.memory_space<vmem>>, vector<256x128xbf16>,
    %cst_5 = arith.constant dense<0.000000e+00> : vector<128xf32>
    %5 = vector.multi_reduction <add>, %2, %cst_5 [0] : vector<256x128xf32> to vector<128xf32>
    %6 = vector.shape_cast %5 : vector<128xf32> to vector<1x128xf32>
    %7 = arith.mulf %2, %2 : vector<256x128xf32>
    %cst_6 = arith.constant dense<0.000000e+00> : vector<128xf32>
    %8 = vector.multi_reduction <add>, %7, %cst_6 [0] : vector<256x128xf32> to vector<128xf32>
    %9 = vector.shape_cast %8 : vector<128xf32> to vector<1x128xf32>
    %10 = tpu.concatenate %6, %9 in 0 : vector<1x128xf32>, vector<1x128xf32> -> vector<2x128xf32>
    %11 = vector.shape_cast %10 : vector<2x128xf32> to vector<1x2x128xf32>
    %c0_7 = arith.constant 0 : index
    %c0_8 = arith.constant 0 : index
    %c0_9 = arith.constant 0 : index
    %12 = vector.load %arg6[%c0_7, %c0_8, %c0_9] : memref<1x2x128xf32, #tpu.memory_space<vmem>>, vector<1x2x128xf32>
    tpu.vector_store %arg6[%c0_7, %c0_8, %c0_9], %11 {strides = array<i32>} : memref<1x2x128xf32, #tpu.memory_space<vmem>>, vector<1x2x128xf32>,
    return
  }
  func.func @transform_0(%arg0: i32, %arg1: i32, %arg2: i32) -> (i32, i32) {
    %c0_i32 = arith.constant 0 : i32
    return %arg0, %arg2 : i32, i32
  }
  func.func @transform_1(%arg0: i32, %arg1: i32, %arg2: i32) -> (i32, i32) {
    %c0_i32 = arith.constant 0 : i32
    return %arg2, %arg1 : i32, i32
  }
  func.func @transform_2(%arg0: i32, %arg1: i32, %arg2: i32) -> (i32, i32) {
    %c0_i32 = arith.constant 0 : i32
    return %arg0, %arg1 : i32, i32
  }
  func.func @transform_3(%arg0: i32, %arg1: i32, %arg2: i32) -> (i32, i32, i32) {
    %c0_i32 = arith.constant 0 : i32
    %c0_i32_0 = arith.constant 0 : i32
    return %arg0, %c0_i32, %arg1 : i32, i32, i32
  }
}

module attributes {stable_mosaic.version = 11 : i64} {
  func.func @kernel(%arg0: i32, %arg1: i32, %arg2: memref<512x128xbf16, #tpu.memory_space<vmem>>, %arg3: memref<1x128xf32, #tpu.memory_space<vmem>>, %arg4: memref<1x128xf32, #tpu.memory_space<vmem>>, %arg5: memref<512x128xbf16, #tpu.memory_space<vmem>>) attributes {dimension_semantics = [#tpu.dimension_semantics<parallel>, #tpu.dimension_semantics<parallel>], iteration_bounds = array<i64: 4, 1>, scalar_prefetch = 0 : i64, scratch_operands = 0 : i64, tpu.core_type = #tpu.core_type<tc>, window_params = [{transform_indices = @transform_0, window_bounds = array<i64: 512, 128>}, {transform_indices = @transform_1, window_bounds = array<i64: 1, 128>}, {transform_indices = @transform_2, window_bounds = array<i64: 1, 128>}, {transform_indices = @transform_3, window_bounds = array<i64: 512, 128>}]} {
    %c0 = arith.constant 0 : index
    %c0_0 = arith.constant 0 : index
    %0 = vector.load %arg2[%c0, %c0_0] : memref<512x128xbf16, #tpu.memory_space<vmem>>, vector<512x128xbf16>
    %1 = arith.extf %0 : vector<512x128xbf16> to vector<512x128xf32>
    %c0_1 = arith.constant 0 : index
    %c0_2 = arith.constant 0 : index
    %2 = vector.load %arg3[%c0_1, %c0_2] : memref<1x128xf32, #tpu.memory_space<vmem>>, vector<1x128xf32>
    %3 = vector.broadcast %2 : vector<1x128xf32> to vector<512x128xf32>
    %4 = arith.mulf %1, %3 : vector<512x128xf32>
    %c0_3 = arith.constant 0 : index
    %c0_4 = arith.constant 0 : index
    %5 = vector.load %arg4[%c0_3, %c0_4] : memref<1x128xf32, #tpu.memory_space<vmem>>, vector<1x128xf32>
    %6 = vector.broadcast %5 : vector<1x128xf32> to vector<512x128xf32>
    %7 = arith.addf %4, %6 : vector<512x128xf32>
    %cst = arith.constant 0.000000e+00 : f32
    %8 = vector.broadcast %cst : f32 to vector<512x128xf32>
    %9 = arith.maximumf %7, %8 : vector<512x128xf32>
    %10 = arith.truncf %9 : vector<512x128xf32> to vector<512x128xbf16>
    %c0_5 = arith.constant 0 : index
    %c0_6 = arith.constant 0 : index
    %11 = vector.load %arg5[%c0_5, %c0_6] : memref<512x128xbf16, #tpu.memory_space<vmem>>, vector<512x128xbf16>
    tpu.vector_store %arg5[%c0_5, %c0_6], %10 {strides = array<i32>} : memref<512x128xbf16, #tpu.memory_space<vmem>>, vector<512x128xbf16>,
    return
  }
  func.func @transform_0(%arg0: i32, %arg1: i32) -> (i32, i32) {
    %c0_i32 = arith.constant 0 : i32
    return %arg0, %arg1 : i32, i32
  }
  func.func @transform_1(%arg0: i32, %arg1: i32) -> (i32, i32) {
    %c0_i32 = arith.constant 0 : i32
    %c0_i32_0 = arith.constant 0 : i32
    return %c0_i32, %arg1 : i32, i32
  }
  func.func @transform_2(%arg0: i32, %arg1: i32) -> (i32, i32) {
    %c0_i32 = arith.constant 0 : i32
    %c0_i32_0 = arith.constant 0 : i32
    return %c0_i32, %arg1 : i32, i32
  }
  func.func @transform_3(%arg0: i32, %arg1: i32) -> (i32, i32) {
    %c0_i32 = arith.constant 0 : i32
    return %arg0, %arg1 : i32, i32
  }
}

</mosaic_0001>

<llo_original>
// kernel: stem_fwd.3
$region0: #{stem_fwd.3}
  #allocation0 [shape = 'u32[]', space=smem, size = 0x4, offset = 0x4, fixed_abs, tag = 'smem constant byte address 0x4 - core index']
  #allocation1 [shape = 'u32[144,128]{1,0:T(1,128)}', space=vmem, size = 0x12000, scoped, tag = 'internal scratch']
  %s0 = inlined_call_operand.vmem [shape: bf16[2048,128], index: 0, kind: input, shape index: {}]
  %s1 = inlined_call_operand.vmem [shape: f32[1,128], index: 1, kind: input, shape index: {}]
  %s2 = inlined_call_operand.vmem [shape: f32[1,128], index: 2, kind: input, shape index: {}]
  %s3 = inlined_call_operand.vmem [shape: bf16[2048,128], index: 3, kind: output, shape index: {}]
  %s4 = sld [smem:[#allocation0]]
  $region45: #{stem_fwd.3} parent=0
    _
  %s6 = ssub.s32 1, %s4
  %s7 = scalar_select 0, %s6, %s4
  loop: start=0, step=1, limit=6
  $region2: #{stem_fwd.3} parent=0 // loop_pre_header
    _
  $region3: #{stem_fwd.3} parent=0 // loop_header
    %s9 = sphi 0, %s13
    %p10 = scmp.ge.s32.totalorder %s9, 6
    %s16 = sphi 0, %s28
    %s17 = sphi 0, %s24
    %s18 = sphi 0, %s16
    %s19 = sphi 0, %s17
    %s20 = sphi 0, %s18
    %s21 = sphi 0, %s19
    %s33 = sphi 0, %s35
    %s36 = sphi 0, %s33
    %s37 = sphi 0, %s36
    %s53 = sphi 0, %s37
    %s59 = sphi 0, %s61
    %s62 = sphi 0, %s59
    %s63 = sphi 0, %s62
    %s79 = sphi 0, %s63
    %s85 = sphi 0, %s87
    %s88 = sphi 0, %s85
    %s89 = sphi 0, %s88
    %s105 = sphi 0, %s89
    %s113 = sphi 0, %s115
    %s116 = sphi 0, %s113
    %s117 = sphi 0, %s116
    %s133 = sphi 0, %s117
  $region4: #{stem_fwd.3} parent=0 // loop_header_branch
    %12 = sbr.rel (%p10) target = $region8
  $region5: #{stem_fwd.3} parent=0 // loop_body
    %s14 = ssub.s32 %s9, 1
    %s15 = ssub.s32 %s9, 2
    %s22 = sadd.s32 1, %s17
    %p23 = scmp.ge.s32.totalorder %s22, 1
    %s24 = scalar_select %p23, 0, %s22
    %s25 = sadd.s32 1, %s16
    %s26 = scalar_select %p23, %s25, %s16
    %p27 = scmp.ge.s32.totalorder %s26, 4
    %s28 = scalar_select %p27, 0, %s26
    %s29 = ssub.s32 %s16, %s28
    %s30 = ssub.s32 %s17, %s24
    %s31 = sor.u32 %s29, %s30
    %p32 = scmp.eq.s32.totalorder %s31, 0
    %s34 = sadd.s32 %s33, 1
    %s35 = scalar_select %p32, %s33, %s34
    %p38 = pneg %p32
    %p39 = scmp.eq.s32.totalorder %s9, 3
    %p40 = por %p38, %p39
    %p41 = scmp.ne.s32.totalorder %s33, %s36
    %p42 = scmp.eq.s32.totalorder %s9, 0
    %p43 = por %p41, %p42
    %p44 = scmp.ne.s32.totalorder %s33, %s36
    %p45 = scmp.eq.s32.totalorder %s14, 3
    %p46 = por %p44, %p45
    %p47 = scmp.ne.s32.totalorder %s36, %s37
    %p48 = scmp.eq.s32.totalorder %s14, 0
    %p49 = por %p47, %p48
    %p50 = scmp.ne.s32.totalorder %s36, %s37
    %p51 = scmp.eq.s32.totalorder %s15, 3
    %p52 = por %p50, %p51
    %p54 = scmp.ne.s32.totalorder %s37, %s53
    %p55 = scmp.eq.s32.totalorder %s15, 0
    %p56 = por %p54, %p55
    %s57 = ssub.s32 %s17, %s24
    %p58 = scmp.eq.s32.totalorder %s57, 0
    %s60 = sadd.s32 %s59, 1
    %s61 = scalar_select %p58, %s59, %s60
    %p64 = pneg %p58
    %p65 = scmp.eq.s32.totalorder %s9, 3
    %p66 = por %p64, %p65
    %p67 = scmp.ne.s32.totalorder %s59, %s62
    %p68 = scmp.eq.s32.totalorder %s9, 0
    %p69 = por %p67, %p68
    %p70 = scmp.ne.s32.totalorder %s59, %s62
    %p71 = scmp.eq.s32.totalorder %s14, 3
    %p72 = por %p70, %p71
    %p73 = scmp.ne.s32.totalorder %s62, %s63
    %p74 = scmp.eq.s32.totalorder %s14, 0
    %p75 = por %p73, %p74
    %p76 = scmp.ne.s32.totalorder %s62, %s63
    %p77 = scmp.eq.s32.totalorder %s15, 3
    %p78 = por %p76, %p77
    %p80 = scmp.ne.s32.totalorder %s63, %s79
    %p81 = scmp.eq.s32.totalorder %s15, 0
    %p82 = por %p80, %p81
    %s83 = ssub.s32 %s17, %s24
    %p84 = scmp.eq.s32.totalorder %s83, 0
    %s86 = sadd.s32 %s85, 1
    %s87 = scalar_select %p84, %s85, %s86
    %p90 = pneg %p84
    %p91 = scmp.eq.s32.totalorder %s9, 3
    %p92 = por %p90, %p91
    %p93 = scmp.ne.s32.totalorder %s85, %s88
    %p94 = scmp.eq.s32.totalorder %s9, 0
    %p95 = por %p93, %p94
    %p96 = scmp.ne.s32.totalorder %s85, %s88
    %p97 = scmp.eq.s32.totalorder %s14, 3
    %p98 = por %p96, %p97
    %p99 = scmp.ne.s32.totalorder %s88, %s89
    %p100 = scmp.eq.s32.totalorder %s14, 0
    %p101 = por %p99, %p100
    %p102 = scmp.ne.s32.totalorder %s88, %s89
    %p103 = scmp.eq.s32.totalorder %s15, 3
    %p104 = por %p102, %p103
    %p106 = scmp.ne.s32.totalorder %s89, %s105
    %p107 = scmp.eq.s32.totalorder %s15, 0
    %p108 = por %p106, %p107
    %s109 = ssub.s32 %s16, %s28
    %s110 = ssub.s32 %s17, %s24
    %s111 = sor.u32 %s109, %s110
    %p112 = scmp.eq.s32.totalorder %s111, 0
    %s114 = sadd.s32 %s113, 1
    %s115 = scalar_select %p112, %s113, %s114
    %p118 = pneg %p112
    %p119 = scmp.eq.s32.totalorder %s9, 3
    %p120 = por %p118, %p119
    %p121 = scmp.ne.s32.totalorder %s113, %s116
    %p122 = scmp.eq.s32.totalorder %s9, 0
    %p123 = por %p121, %p122
    %p124 = scmp.ne.s32.totalorder %s113, %s116
    %p125 = scmp.eq.s32.totalorder %s14, 3
    %p126 = por %p124, %p125
    %p127 = scmp.ne.s32.totalorder %s116, %s117
    %p128 = scmp.eq.s32.totalorder %s14, 0
    %p129 = por %p127, %p128
    %p130 = scmp.ne.s32.totalorder %s116, %s117
    %p131 = scmp.eq.s32.totalorder %s15, 3
    %p132 = por %p130, %p131
    %p134 = scmp.ne.s32.totalorder %s117, %s133
    %p135 = scmp.eq.s32.totalorder %s15, 0
    %p136 = por %p134, %p135
    %p137 = scmp.le.s32.totalorder 1, %s9
    %p138 = scmp.lt.s32.totalorder %s9, 5
    %p139 = pnand %p137, %p138
    %p140 = pneg %p139
    // Predicated region
    $region9: #{stem_fwd.3} parent=5 // pred_check
      _
    $region10: #{stem_fwd.3} parent=5 // pred_check_branch
      %142 = sbr.rel (%p139) target = $region12
    $region11: #{stem_fwd.3} parent=5 // pred_region
      %s143 = ssub.s32 %s9, 1
      // Predicated region
      $region13: #{stem_fwd.3} parent=11 // pred_check
        %p144 = pneg %p75
      $region14: #{stem_fwd.3} parent=11 // pred_check_branch
        %146 = sbr.rel (%p144) target = $region16
      $region15: #{stem_fwd.3} parent=11 // pred_region
        %p147 = scmp.lt.s32.totalorder %s19, 0
        %s148 = scalar_select %p147, %s19, 0
        %s149 = scalar_lea.vmem %s1, %s148
      $region16: #{stem_fwd.3} parent=11 // pred_fallthru
        _
      // Predicated region
      $region17: #{stem_fwd.3} parent=11 // pred_check
        %p150 = pneg %p101
      $region18: #{stem_fwd.3} parent=11 // pred_check_branch
        %152 = sbr.rel (%p150) target = $region20
      $region19: #{stem_fwd.3} parent=11 // pred_region
        %p153 = scmp.lt.s32.totalorder %s19, 0
        %s154 = scalar_select %p153, %s19, 0
        %s155 = scalar_lea.vmem %s2, %s154
      $region20: #{stem_fwd.3} parent=11 // pred_fallthru
        _
    $region12: #{stem_fwd.3} parent=5 // pred_fallthru
      _
    %p156 = scmp.lt.s32.totalorder %s9, 4
    // Predicated region
    $region21: #{stem_fwd.3} parent=5 // pred_check
      %p157 = pneg %p156
    $region22: #{stem_fwd.3} parent=5 // pred_check_branch
      %159 = sbr.rel (%p157) target = $region24
    $region23: #{stem_fwd.3} parent=5 // pred_region
      // Predicated region
      $region25: #{stem_fwd.3} parent=23 // pred_check
        %p160 = pneg %p43
      $region26: #{stem_fwd.3} parent=23 // pred_check_branch
        %162 = sbr.rel (%p160) target = $region28
      $region27: #{stem_fwd.3} parent=23 // pred_region
        %s163 = smul.u32 64, %s16
        %p164 = scmp.lt.s32.totalorder %s163, 255
        %s165 = scalar_select %p164, %s163, 255
        %p166 = scmp.lt.s32.totalorder %s17, 0
        %s167 = scalar_select %p166, %s17, 0
        %s168 = sadd.s32 %s167, %s165
        %s169 = smul.addr %s168, 4
        %s170 = scalar_lea.vmem %s0, %s169
        %s171 = smul.u32 64, %s16
      $region28: #{stem_fwd.3} parent=23 // pred_fallthru
        _
    $region24: #{stem_fwd.3} parent=5 // pred_fallthru
      _
    %p172 = scmp.le.s32.totalorder 1, %s9
    %p173 = scmp.lt.s32.totalorder %s9, 5
    %p174 = pnand %p172, %p173
    %p175 = pneg %p174
    // Predicated region
    $region29: #{stem_fwd.3} parent=5 // pred_check
      _
    $region30: #{stem_fwd.3} parent=5 // pred_check_branch
      %177 = sbr.rel (%p174) target = $region32
    $region31: #{stem_fwd.3} parent=5 // pred_region
      %s178 = ssub.s32 %s9, 1
      %s179 = smul.u32 64, %s18
      %p180 = scmp.lt.s32.totalorder %s179, 255
      %s181 = scalar_select %p180, %s179, 255
      %p182 = scmp.lt.s32.totalorder %s19, 0
      %s183 = scalar_select %p182, %s19, 0
      %s184 = sadd.s32 %s183, %s181
      %s185 = smul.addr %s184, 4
      %s186 = scalar_lea.vmem %s0, %s185
      %p187 = pneg %p49
      %p188 = pneg %p46
      %p189 = scmp.lt.s32.totalorder %s19, 0
      %s190 = scalar_select %p189, %s19, 0
      %s191 = scalar_lea.vmem %s1, %s190
      %p192 = pneg %p75
      %p193 = pneg %p72
      %p194 = scmp.lt.s32.totalorder %s19, 0
      %s195 = scalar_select %p194, %s19, 0
      %s196 = scalar_lea.vmem %s2, %s195
      %p197 = pneg %p101
      %p198 = pneg %p98
      %p199 = pneg %p129
      %p200 = pneg %p126
      %s201 = smul.u32 64, %s18
      %p202 = scmp.lt.s32.totalorder %s201, 255
      %s203 = scalar_select %p202, %s201, 255
      %p204 = scmp.lt.s32.totalorder %s19, 0
      %s205 = scalar_select %p204, %s19, 0
      %s206 = sadd.s32 %s205, %s203
      %s207 = smul.addr %s206, 4
      %s208 = scalar_lea.vmem %s3, %s207
      %s209 = smul.u32 64, %s18
      %p210 = scmp.lt.s32.totalorder %s209, 255
      %s211 = scalar_select %p210, %s209, 255
      %p212 = scmp.lt.s32.totalorder %s19, 0
      %s213 = scalar_select %p212, %s19, 0
      %s214 = sadd.s32 %s213, %s211
      %s215 = smul.addr %s214, 4
      %s216 = scalar_lea.vmem %s0, %s215
      %s217 = smul.u32 64, %s18
      %p218 = scmp.lt.s32.totalorder %s19, 0
      %s219 = scalar_select %p218, %s19, 0
      %s220 = scalar_lea.vmem %s1, %s219
      %p221 = scmp.lt.s32.totalorder %s19, 0
      %s222 = scalar_select %p221, %s19, 0
      %s223 = scalar_lea.vmem %s2, %s222
      %s224 = smul.u32 64, %s18
      %p225 = scmp.lt.s32.totalorder %s224, 255
      %s226 = scalar_select %p225, %s224, 255
      %p227 = scmp.lt.s32.totalorder %s19, 0
      %s228 = scalar_select %p227, %s19, 0
      %s229 = sadd.s32 %s228, %s226
      %s230 = smul.addr %s229, 4
      %s231 = scalar_lea.vmem %s3, %s230
      %s232 = smul.u32 64, %s18
      %v233 = vld [vmem:[%s216] sm:$0xf]
      %v234 = vld [vmem:[%s216 + $0x4] sm:$0xf]
      %v235 = vld [vmem:[%s216 + $0x8] sm:$0xf]
      %v236 = vld [vmem:[%s216 + $0xc] sm:$0xf]
      %v237 = vld [vmem:[%s216 + $0x10] sm:$0xf]
      %v238 = vld [vmem:[%s216 + $0x14] sm:$0xf]
      %v239 = vld [vmem:[%s216 + $0x18] sm:$0xf]
      %v240 = vld [vmem:[%s216 + $0x1c] sm:$0xf]
      %v241 = vld [vmem:[%s216 + $0x20] sm:$0xf]
      %v242 = vld [vmem:[%s216 + $0x24] sm:$0xf]
      %v243 = vld [vmem:[%s216 + $0x28] sm:$0xf]
      %v244 = vld [vmem:[%s216 + $0x2c] sm:$0xf]
      %v245 = vld [vmem:[%s216 + $0x30] sm:$0xf]
      %v246 = vld [vmem:[%s216 + $0x34] sm:$0xf]
      %v247 = vld [vmem:[%s216 + $0x38] sm:$0xf]
      %v248 = vld [vmem:[%s216 + $0x3c] sm:$0xf]
      %v249 = vld [vmem:[%s216 + $0x40] sm:$0xf]
      %v250 = vld [vmem:[%s216 + $0x44] sm:$0xf]
      %v251 = vld [vmem:[%s216 + $0x48] sm:$0xf]
      %v252 = vld [vmem:[%s216 + $0x4c] sm:$0xf]
      %v253 = vld [vmem:[%s216 + $0x50] sm:$0xf]
      %v254 = vld [vmem:[%s216 + $0x54] sm:$0xf]
      %v255 = vld [vmem:[%s216 + $0x58] sm:$0xf]
      %v256 = vld [vmem:[%s216 + $0x5c] sm:$0xf]
      %v257 = vld [vmem:[%s216 + $0x60] sm:$0xf]
      %v258 = vld [vmem:[%s216 + $0x64] sm:$0xf]
      %v259 = vld [vmem:[%s216 + $0x68] sm:$0xf]
      %v260 = vld [vmem:[%s216 + $0x6c] sm:$0xf]
      %v261 = vld [vmem:[%s216 + $0x70] sm:$0xf]
      %v262 = vld [vmem:[%s216 + $0x74] sm:$0xf]
      %v263 = vld [vmem:[%s216 + $0x78] sm:$0xf]
      %v264 = vld [vmem:[%s216 + $0x7c] sm:$0xf]
      %v265 = vld [vmem:[%s216 + $0x80] sm:$0xf]
      %v266 = vld [vmem:[%s216 + $0x84] sm:$0xf]
      %v267 = vld [vmem:[%s216 + $0x88] sm:$0xf]
      %v268 = vld [vmem:[%s216 + $0x8c] sm:$0xf]
      %v269 = vld [vmem:[%s216 + $0x90] sm:$0xf]
      %v270 = vld [vmem:[%s216 + $0x94] sm:$0xf]
      %v271 = vld [vmem:[%s216 + $0x98] sm:$0xf]
      %v272 = vld [vmem:[%s216 + $0x9c] sm:$0xf]
      %v273 = vld [vmem:[%s216 + $0xa0] sm:$0xf]
      %v274 = vld [vmem:[%s216 + $0xa4] sm:$0xf]
      %v275 = vld [vmem:[%s216 + $0xa8] sm:$0xf]
      %v276 = vld [vmem:[%s216 + $0xac] sm:$0xf]
      %v277 = vld [vmem:[%s216 + $0xb0] sm:$0xf]
      %v278 = vld [vmem:[%s216 + $0xb4] sm:$0xf]
      %v279 = vld [vmem:[%s216 + $0xb8] sm:$0xf]
      %v280 = vld [vmem:[%s216 + $0xbc] sm:$0xf]
      %v281 = vld [vmem:[%s216 + $0xc0] sm:$0xf]
      %v282 = vld [vmem:[%s216 + $0xc4] sm:$0xf]
      %v283 = vld [vmem:[%s216 + $0xc8] sm:$0xf]
      %v284 = vld [vmem:[%s216 + $0xcc] sm:$0xf]
      %v285 = vld [vmem:[%s216 + $0xd0] sm:$0xf]
      %v286 = vld [vmem:[%s216 + $0xd4] sm:$0xf]
      %v287 = vld [vmem:[%s216 + $0xd8] sm:$0xf]
      %v288 = vld [vmem:[%s216 + $0xdc] sm:$0xf]
      %v289 = vld [vmem:[%s216 + $0xe0] sm:$0xf]
      %v290 = vld [vmem:[%s216 + $0xe4] sm:$0xf]
      %v291 = vld [vmem:[%s216 + $0xe8] sm:$0xf]
      %v292 = vld [vmem:[%s216 + $0xec] sm:$0xf]
      %v293 = vld [vmem:[%s216 + $0xf0] sm:$0xf]
      %v294 = vld [vmem:[%s216 + $0xf4] sm:$0xf]
      %v295 = vld [vmem:[%s216 + $0xf8] sm:$0xf]
      %v296 = vld [vmem:[%s216 + $0xfc] sm:$0xf]
      %v297 = vunpack.c.l.bf16 %v233
      %v298 = vunpack.c.l.bf16 %v234
      %v299 = vunpack.c.l.bf16 %v235
      %v300 = vunpack.c.l.bf16 %v236
      %v301 = vunpack.c.l.bf16 %v237
      %v302 = vunpack.c.l.bf16 %v238
      %v303 = vunpack.c.l.bf16 %v239
      %v304 = vunpack.c.l.bf16 %v240
      %v305 = vunpack.c.l.bf16 %v241
      %v306 = vunpack.c.l.bf16 %v242
      %v307 = vunpack.c.l.bf16 %v243
      %v308 = vunpack.c.l.bf16 %v244
      %v309 = vunpack.c.l.bf16 %v245
      %v310 = vunpack.c.l.bf16 %v246
      %v311 = vunpack.c.l.bf16 %v247
      %v312 = vunpack.c.l.bf16 %v248
      %v313 = vunpack.c.l.bf16 %v249
      %v314 = vunpack.c.l.bf16 %v250
      %v315 = vunpack.c.l.bf16 %v251
      %v316 = vunpack.c.l.bf16 %v252
      %v317 = vunpack.c.l.bf16 %v253
      %v318 = vunpack.c.l.bf16 %v254
      %v319 = vunpack.c.l.bf16 %v255
      %v320 = vunpack.c.l.bf16 %v256
      %v321 = vunpack.c.l.bf16 %v257
      %v322 = vunpack.c.l.bf16 %v258
      %v323 = vunpack.c.l.bf16 %v259
      %v324 = vunpack.c.l.bf16 %v260
      %v325 = vunpack.c.l.bf16 %v261
      %v326 = vunpack.c.l.bf16 %v262
      %v327 = vunpack.c.l.bf16 %v263
      %v328 = vunpack.c.l.bf16 %v264
      %v329 = vunpack.c.l.bf16 %v265
      %v330 = vunpack.c.l.bf16 %v266
      %v331 = vunpack.c.l.bf16 %v267
      %v332 = vunpack.c.l.bf16 %v268
      %v333 = vunpack.c.l.bf16 %v269
      %v334 = vunpack.c.l.bf16 %v270
      %v335 = vunpack.c.l.bf16 %v271
      %v336 = vunpack.c.l.bf16 %v272
      %v337 = vunpack.c.l.bf16 %v273
      %v338 = vunpack.c.l.bf16 %v274
      %v339 = vunpack.c.l.bf16 %v275
      %v340 = vunpack.c.l.bf16 %v276
      %v341 = vunpack.c.l.bf16 %v277
      %v342 = vunpack.c.l.bf16 %v278
      %v343 = vunpack.c.l.bf16 %v279
      %v344 = vunpack.c.l.bf16 %v280
      %v345 = vunpack.c.l.bf16 %v281
      %v346 = vunpack.c.l.bf16 %v282
      %v347 = vunpack.c.l.bf16 %v283
      %v348 = vunpack.c.l.bf16 %v284
      %v349 = vunpack.c.l.bf16 %v285
      %v350 = vunpack.c.l.bf16 %v286
      %v351 = vunpack.c.l.bf16 %v287
      %v352 = vunpack.c.l.bf16 %v288
      %v353 = vunpack.c.l.bf16 %v289
      %v354 = vunpack.c.l.bf16 %v290
      %v355 = vunpack.c.l.bf16 %v291
      %v356 = vunpack.c.l.bf16 %v292
      %v357 = vunpack.c.l.bf16 %v293
      %v358 = vunpack.c.l.bf16 %v294
      %v359 = vunpack.c.l.bf16 %v295
      %v360 = vunpack.c.l.bf16 %v296
      %v361 = vld [vmem:[%s220] sm:$0x1]
      %v363 = vlaneseq
      %v364 = vshrl.u32 %v363, 7
      %v365 = vsub.s32 0, %v364
      %v366 = vrot.slane %v361, %v365
      %v368 = vmul.f32 %v297, %v366
      %v369 = vmul.f32 %v298, %v366
      %v370 = vmul.f32 %v299, %v366
      %v371 = vmul.f32 %v300, %v366
      %v372 = vmul.f32 %v301, %v366
      %v373 = vmul.f32 %v302, %v366
      %v374 = vmul.f32 %v303, %v366
      %v375 = vmul.f32 %v304, %v366
      %v376 = vmul.f32 %v305, %v366
      %v377 = vmul.f32 %v306, %v366
      %v378 = vmul.f32 %v307, %v366
      %v379 = vmul.f32 %v308, %v366
      %v380 = vmul.f32 %v309, %v366
      %v381 = vmul.f32 %v310, %v366
      %v382 = vmul.f32 %v311, %v366
      %v383 = vmul.f32 %v312, %v366
      %v384 = vmul.f32 %v313, %v366
      %v385 = vmul.f32 %v314, %v366
      %v386 = vmul.f32 %v315, %v366
      %v387 = vmul.f32 %v316, %v366
      %v388 = vmul.f32 %v317, %v366
      %v389 = vmul.f32 %v318, %v366
      %v390 = vmul.f32 %v319, %v366
      %v391 = vmul.f32 %v320, %v366
      %v392 = vmul.f32 %v321, %v366
      %v393 = vmul.f32 %v322, %v366
      %v394 = vmul.f32 %v323, %v366
      %v395 = vmul.f32 %v324, %v366
      %v396 = vmul.f32 %v325, %v366
      %v397 = vmul.f32 %v326, %v366
      %v398 = vmul.f32 %v327, %v366
      %v399 = vmul.f32 %v328, %v366
      %v400 = vmul.f32 %v329, %v366
      %v401 = vmul.f32 %v330, %v366
      %v402 = vmul.f32 %v331, %v366
      %v403 = vmul.f32 %v332, %v366
      %v404 = vmul.f32 %v333, %v366
      %v405 = vmul.f32 %v334, %v366
      %v406 = vmul.f32 %v335, %v366
      %v407 = vmul.f32 %v336, %v366
      %v408 = vmul.f32 %v337, %v366
      %v409 = vmul.f32 %v338, %v366
      %v410 = vmul.f32 %v339, %v366
      %v411 = vmul.f32 %v340, %v366
      %v412 = vmul.f32 %v341, %v366
      %v413 = vmul.f32 %v342, %v366
      %v414 = vmul.f32 %v343, %v366
      %v415 = vmul.f32 %v344, %v366
      %v416 = vmul.f32 %v345, %v366
      %v417 = vmul.f32 %v346, %v366
      %v418 = vmul.f32 %v347, %v366
      %v419 = vmul.f32 %v348, %v366
      %v420 = vmul.f32 %v349, %v366
      %v421 = vmul.f32 %v350, %v366
      %v422 = vmul.f32 %v351, %v366
      %v423 = vmul.f32 %v352, %v366
      %v424 = vmul.f32 %v353, %v366
      %v425 = vmul.f32 %v354, %v366
      %v426 = vmul.f32 %v355, %v366
      %v427 = vmul.f32 %v356, %v366
      %v428 = vmul.f32 %v357, %v366
      %v429 = vmul.f32 %v358, %v366
      %v430 = vmul.f32 %v359, %v366
      %v431 = vmul.f32 %v360, %v366
      %v432 = vld [vmem:[%s223] sm:$0x1]
      %v434 = vlaneseq
      %v435 = vshrl.u32 %v434, 7
      %v436 = vsub.s32 0, %v435
      %v437 = vrot.slane %v432, %v436
      %v439 = vadd.f32 %v368, %v437
      %v440 = vadd.f32 %v369, %v437
      %v441 = vadd.f32 %v370, %v437
      %v442 = vadd.f32 %v371, %v437
      %v443 = vadd.f32 %v372, %v437
      %v444 = vadd.f32 %v373, %v437
      %v445 = vadd.f32 %v374, %v437
      %v446 = vadd.f32 %v375, %v437
      %v447 = vadd.f32 %v376, %v437
      %v448 = vadd.f32 %v377, %v437
      %v449 = vadd.f32 %v378, %v437
      %v450 = vadd.f32 %v379, %v437
      %v451 = vadd.f32 %v380, %v437
      %v452 = vadd.f32 %v381, %v437
      %v453 = vadd.f32 %v382, %v437
      %v454 = vadd.f32 %v383, %v437
      %v455 = vadd.f32 %v384, %v437
      %v456 = vadd.f32 %v385, %v437
      %v457 = vadd.f32 %v386, %v437
      %v458 = vadd.f32 %v387, %v437
      %v459 = vadd.f32 %v388, %v437
      %v460 = vadd.f32 %v389, %v437
      %v461 = vadd.f32 %v390, %v437
      %v462 = vadd.f32 %v391, %v437
      %v463 = vadd.f32 %v392, %v437
      %v464 = vadd.f32 %v393, %v437
      %v465 = vadd.f32 %v394, %v437
      %v466 = vadd.f32 %v395, %v437
      %v467 = vadd.f32 %v396, %v437
      %v468 = vadd.f32 %v397, %v437
      %v469 = vadd.f32 %v398, %v437
      %v470 = vadd.f32 %v399, %v437
      %v471 = vadd.f32 %v400, %v437
      %v472 = vadd.f32 %v401, %v437
      %v473 = vadd.f32 %v402, %v437
      %v474 = vadd.f32 %v403, %v437
      %v475 = vadd.f32 %v404, %v437
      %v476 = vadd.f32 %v405, %v437
      %v477 = vadd.f32 %v406, %v437
      %v478 = vadd.f32 %v407, %v437
      %v479 = vadd.f32 %v408, %v437
      %v480 = vadd.f32 %v409, %v437
      %v481 = vadd.f32 %v410, %v437
      %v482 = vadd.f32 %v411, %v437
      %v483 = vadd.f32 %v412, %v437
      %v484 = vadd.f32 %v413, %v437
      %v485 = vadd.f32 %v414, %v437
      %v486 = vadd.f32 %v415, %v437
      %v487 = vadd.f32 %v416, %v437
      %v488 = vadd.f32 %v417, %v437
      %v489 = vadd.f32 %v418, %v437
      %v490 = vadd.f32 %v419, %v437
      %v491 = vadd.f32 %v420, %v437
      %v492 = vadd.f32 %v421, %v437
      %v493 = vadd.f32 %v422, %v437
      %v494 = vadd.f32 %v423, %v437
      %v495 = vadd.f32 %v424, %v437
      %v496 = vadd.f32 %v425, %v437
      %v497 = vadd.f32 %v426, %v437
      %v498 = vadd.f32 %v427, %v437
      %v499 = vadd.f32 %v428, %v437
      %v500 = vadd.f32 %v429, %v437
      %v501 = vadd.f32 %v430, %v437
      %v502 = vadd.f32 %v431, %v437
      %v503 = vmax.f32 %v439, 0.0
      %v504 = vmax.f32 %v440, 0.0
      %v505 = vmax.f32 %v441, 0.0
      %v506 = vmax.f32 %v442, 0.0
      %v507 = vmax.f32 %v443, 0.0
      %v508 = vmax.f32 %v444, 0.0
      %v509 = vmax.f32 %v445, 0.0
      %v510 = vmax.f32 %v446, 0.0
      %v511 = vmax.f32 %v447, 0.0
      %v512 = vmax.f32 %v448, 0.0
      %v513 = vmax.f32 %v449, 0.0
      %v514 = vmax.f32 %v450, 0.0
      %v515 = vmax.f32 %v451, 0.0
      %v516 = vmax.f32 %v452, 0.0
      %v517 = vmax.f32 %v453, 0.0
      %v518 = vmax.f32 %v454, 0.0
      %v519 = vmax.f32 %v455, 0.0
      %v520 = vmax.f32 %v456, 0.0
      %v521 = vmax.f32 %v457, 0.0
      %v522 = vmax.f32 %v458, 0.0
      %v523 = vmax.f32 %v459, 0.0
      %v524 = vmax.f32 %v460, 0.0
      %v525 = vmax.f32 %v461, 0.0
      %v526 = vmax.f32 %v462, 0.0
      %v527 = vmax.f32 %v463, 0.0
      %v528 = vmax.f32 %v464, 0.0
      %v529 = vmax.f32 %v465, 0.0
      %v530 = vmax.f32 %v466, 0.0
      %v531 = vmax.f32 %v467, 0.0
      %v532 = vmax.f32 %v468, 0.0
      %v533 = vmax.f32 %v469, 0.0
      %v534 = vmax.f32 %v470, 0.0
      %v535 = vmax.f32 %v471, 0.0
      %v536 = vmax.f32 %v472, 0.0
      %v537 = vmax.f32 %v473, 0.0
      %v538 = vmax.f32 %v474, 0.0
      %v539 = vmax.f32 %v475, 0.0
      %v540 = vmax.f32 %v476, 0.0
      %v541 = vmax.f32 %v477, 0.0
      %v542 = vmax.f32 %v478, 0.0
      %v543 = vmax.f32 %v479, 0.0
      %v544 = vmax.f32 %v480, 0.0
      %v545 = vmax.f32 %v481, 0.0
      %v546 = vmax.f32 %v482, 0.0
      %v547 = vmax.f32 %v483, 0.0
      %v548 = vmax.f32 %v484, 0.0
      %v549 = vmax.f32 %v485, 0.0
      %v550 = vmax.f32 %v486, 0.0
      %v551 = vmax.f32 %v487, 0.0
      %v552 = vmax.f32 %v488, 0.0
      %v553 = vmax.f32 %v489, 0.0
      %v554 = vmax.f32 %v490, 0.0
      %v555 = vmax.f32 %v491, 0.0
      %v556 = vmax.f32 %v492, 0.0
      %v557 = vmax.f32 %v493, 0.0
      %v558 = vmax.f32 %v494, 0.0
      %v559 = vmax.f32 %v495, 0.0
      %v560 = vmax.f32 %v496, 0.0
      %v561 = vmax.f32 %v497, 0.0
      %v562 = vmax.f32 %v498, 0.0
      %v563 = vmax.f32 %v499, 0.0
      %v564 = vmax.f32 %v500, 0.0
      %v565 = vmax.f32 %v501, 0.0
      %v566 = vmax.f32 %v502, 0.0
      %v567 = vpack.c.bf16 %v504, %v503
      %v568 = vpack.c.bf16 %v506, %v505
      %v569 = vpack.c.bf16 %v508, %v507
      %v570 = vpack.c.bf16 %v510, %v509
      %v571 = vpack.c.bf16 %v512, %v511
      %v572 = vpack.c.bf16 %v514, %v513
      %v573 = vpack.c.bf16 %v516, %v515
      %v574 = vpack.c.bf16 %v518, %v517
      %v575 = vpack.c.bf16 %v520, %v519
      %v576 = vpack.c.bf16 %v522, %v521
      %v577 = vpack.c.bf16 %v524, %v523
      %v578 = vpack.c.bf16 %v526, %v525
      %v579 = vpack.c.bf16 %v528, %v527
      %v580 = vpack.c.bf16 %v530, %v529
      %v581 = vpack.c.bf16 %v532, %v531
      %v582 = vpack.c.bf16 %v534, %v533
      %v583 = vpack.c.bf16 %v536, %v535
      %v584 = vpack.c.bf16 %v538, %v537
      %v585 = vpack.c.bf16 %v540, %v539
      %v586 = vpack.c.bf16 %v542, %v541
      %v587 = vpack.c.bf16 %v544, %v543
      %v588 = vpack.c.bf16 %v546, %v545
      %v589 = vpack.c.bf16 %v548, %v547
      %v590 = vpack.c.bf16 %v550, %v549
      %v591 = vpack.c.bf16 %v552, %v551
      %v592 = vpack.c.bf16 %v554, %v553
      %v593 = vpack.c.bf16 %v556, %v555
      %v594 = vpack.c.bf16 %v558, %v557
      %v595 = vpack.c.bf16 %v560, %v559
      %v596 = vpack.c.bf16 %v562, %v561
      %v597 = vpack.c.bf16 %v564, %v563
      %v598 = vpack.c.bf16 %v566, %v565
      %v631 = vunpack.c.l.b16 %v567
      %v632 = vunpack.c.h.b16 %v567
      %v633 = vunpack.c.l.b16 %v568
      %v634 = vunpack.c.h.b16 %v568
      %v635 = vunpack.c.l.b16 %v569
      %v636 = vunpack.c.h.b16 %v569
      %v637 = vunpack.c.l.b16 %v570
      %v638 = vunpack.c.h.b16 %v570
      %v639 = vunpack.c.l.b16 %v571
      %v640 = vunpack.c.h.b16 %v571
      %v641 = vunpack.c.l.b16 %v572
      %v642 = vunpack.c.h.b16 %v572
      %v643 = vunpack.c.l.b16 %v573
      %v644 = vunpack.c.h.b16 %v573
      %v645 = vunpack.c.l.b16 %v574
      %v646 = vunpack.c.h.b16 %v574
      %v647 = vunpack.c.l.b16 %v575
      %v648 = vunpack.c.h.b16 %v575
      %v649 = vunpack.c.l.b16 %v576
      %v650 = vunpack.c.h.b16 %v576
      %v651 = vunpack.c.l.b16 %v577
      %v652 = vunpack.c.h.b16 %v577
      %v653 = vunpack.c.l.b16 %v578
      %v654 = vunpack.c.h.b16 %v578
      %v655 = vunpack.c.l.b16 %v579
      %v656 = vunpack.c.h.b16 %v579
      %v657 = vunpack.c.l.b16 %v580
      %v658 = vunpack.c.h.b16 %v580
      %v659 = vunpack.c.l.b16 %v581
      %v660 = vunpack.c.h.b16 %v581
      %v661 = vunpack.c.l.b16 %v582
      %v662 = vunpack.c.h.b16 %v582
      %v663 = vunpack.c.l.b16 %v583
      %v664 = vunpack.c.h.b16 %v583
      %v665 = vunpack.c.l.b16 %v584
      %v666 = vunpack.c.h.b16 %v584
      %v667 = vunpack.c.l.b16 %v585
      %v668 = vunpack.c.h.b16 %v585
      %v669 = vunpack.c.l.b16 %v586
      %v670 = vunpack.c.h.b16 %v586
      %v671 = vunpack.c.l.b16 %v587
      %v672 = vunpack.c.h.b16 %v587
      %v673 = vunpack.c.l.b16 %v588
      %v674 = vunpack.c.h.b16 %v588
      %v675 = vunpack.c.l.b16 %v589
      %v676 = vunpack.c.h.b16 %v589
      %v677 = vunpack.c.l.b16 %v590
      %v678 = vunpack.c.h.b16 %v590
      %v679 = vunpack.c.l.b16 %v591
      %v680 = vunpack.c.h.b16 %v591
      %v681 = vunpack.c.l.b16 %v592
      %v682 = vunpack.c.h.b16 %v592
      %v683 = vunpack.c.l.b16 %v593
      %v684 = vunpack.c.h.b16 %v593
      %v685 = vunpack.c.l.b16 %v594
      %v686 = vunpack.c.h.b16 %v594
      %v687 = vunpack.c.l.b16 %v595
      %v688 = vunpack.c.h.b16 %v595
      %v689 = vunpack.c.l.b16 %v596
      %v690 = vunpack.c.h.b16 %v596
      %v691 = vunpack.c.l.b16 %v597
      %v692 = vunpack.c.h.b16 %v597
      %v693 = vunpack.c.l.b16 %v598
      %v694 = vunpack.c.h.b16 %v598
      %v695 = vpack.c.b16 %v631, %v631
      %v696 = vpack.c.b16 %v632, %v632
      %v697 = vpack.c.b16 %v633, %v633
      %v698 = vpack.c.b16 %v634, %v634
      %v699 = vpack.c.b16 %v635, %v635
      %v700 = vpack.c.b16 %v636, %v636
      %v701 = vpack.c.b16 %v637, %v637
      %v702 = vpack.c.b16 %v638, %v638
      %v703 = vpack.c.b16 %v639, %v639
      %v704 = vpack.c.b16 %v640, %v640
      %v705 = vpack.c.b16 %v641, %v641
      %v706 = vpack.c.b16 %v642, %v642
      %v707 = vpack.c.b16 %v643, %v643
      %v708 = vpack.c.b16 %v644, %v644
      %v709 = vpack.c.b16 %v645, %v645
      %v710 = vpack.c.b16 %v646, %v646
      %v711 = vpack.c.b16 %v647, %v647
      %v712 = vpack.c.b16 %v648, %v648
      %v713 = vpack.c.b16 %v649, %v649
      %v714 = vpack.c.b16 %v650, %v650
      %v715 = vpack.c.b16 %v651, %v651
      %v716 = vpack.c.b16 %v652, %v652
      %v717 = vpack.c.b16 %v653, %v653
      %v718 = vpack.c.b16 %v654, %v654
      %v719 = vpack.c.b16 %v655, %v655
      %v720 = vpack.c.b16 %v656, %v656
      %v721 = vpack.c.b16 %v657, %v657
      %v722 = vpack.c.b16 %v658, %v658
      %v723 = vpack.c.b16 %v659, %v659
      %v724 = vpack.c.b16 %v660, %v660
      %v725 = vpack.c.b16 %v661, %v661
      %v726 = vpack.c.b16 %v662, %v662
      %v727 = vpack.c.b16 %v663, %v663
      %v728 = vpack.c.b16 %v664, %v664
      %v729 = vpack.c.b16 %v665, %v665
      %v730 = vpack.c.b16 %v666, %v666
      %v731 = vpack.c.b16 %v667, %v667
      %v732 = vpack.c.b16 %v668, %v668
      %v733 = vpack.c.b16 %v669, %v669
      %v734 = vpack.c.b16 %v670, %v670
      %v735 = vpack.c.b16 %v671, %v671
      %v736 = vpack.c.b16 %v672, %v672
      %v737 = vpack.c.b16 %v673, %v673
      %v738 = vpack.c.b16 %v674, %v674
      %v739 = vpack.c.b16 %v675, %v675
      %v740 = vpack.c.b16 %v676, %v676
      %v741 = vpack.c.b16 %v677, %v677
      %v742 = vpack.c.b16 %v678, %v678
      %v743 = vpack.c.b16 %v679, %v679
      %v744 = vpack.c.b16 %v680, %v680
      %v745 = vpack.c.b16 %v681, %v681
      %v746 = vpack.c.b16 %v682, %v682
      %v747 = vpack.c.b16 %v683, %v683
      %v748 = vpack.c.b16 %v684, %v684
      %v749 = vpack.c.b16 %v685, %v685
      %v750 = vpack.c.b16 %v686, %v686
      %v751 = vpack.c.b16 %v687, %v687
      %v752 = vpack.c.b16 %v688, %v688
      %v753 = vpack.c.b16 %v689, %v689
      %v754 = vpack.c.b16 %v690, %v690
      %v755 = vpack.c.b16 %v691, %v691
      %v756 = vpack.c.b16 %v692, %v692
      %v757 = vpack.c.b16 %v693, %v693
      %v758 = vpack.c.b16 %v694, %v694
      %823 = vst [vmem:[%s231] sm:$0xf] %v695
      %824 = vst [vmem:[%s231 + $0x4] sm:$0xf] %v696
      %825 = vst [vmem:[%s231 + $0x8] sm:$0xf] %v697
      %826 = vst [vmem:[%s231 + $0xc] sm:$0xf] %v698
      %827 = vst [vmem:[%s231 + $0x10] sm:$0xf] %v699
      %828 = vst [vmem:[%s231 + $0x14] sm:$0xf] %v700
      %829 = vst [vmem:[%s231 + $0x18] sm:$0xf] %v701
      %830 = vst [vmem:[%s231 + $0x1c] sm:$0xf] %v702
      %831 = vst [vmem:[%s231 + $0x20] sm:$0xf] %v703
      %832 = vst [vmem:[%s231 + $0x24] sm:$0xf] %v704
      %833 = vst [vmem:[%s231 + $0x28] sm:$0xf] %v705
      %834 = vst [vmem:[%s231 + $0x2c] sm:$0xf] %v706
      %835 = vst [vmem:[%s231 + $0x30] sm:$0xf] %v707
      %836 = vst [vmem:[%s231 + $0x34] sm:$0xf] %v708
      %837 = vst [vmem:[%s231 + $0x38] sm:$0xf] %v709
      %838 = vst [vmem:[%s231 + $0x3c] sm:$0xf] %v710
      %839 = vst [vmem:[%s231 + $0x40] sm:$0xf] %v711
      %840 = vst [vmem:[%s231 + $0x44] sm:$0xf] %v712
      %841 = vst [vmem:[%s231 + $0x48] sm:$0xf] %v713
      %842 = vst [vmem:[%s231 + $0x4c] sm:$0xf] %v714
      %843 = vst [vmem:[%s231 + $0x50] sm:$0xf] %v715
      %844 = vst [vmem:[%s231 + $0x54] sm:$0xf] %v716
      %845 = vst [vmem:[%s231 + $0x58] sm:$0xf] %v717
      %846 = vst [vmem:[%s231 + $0x5c] sm:$0xf] %v718
      %847 = vst [vmem:[%s231 + $0x60] sm:$0xf] %v719
      %848 = vst [vmem:[%s231 + $0x64] sm:$0xf] %v720
      %849 = vst [vmem:[%s231 + $0x68] sm:$0xf] %v721
      %850 = vst [vmem:[%s231 + $0x6c] sm:$0xf] %v722
      %851 = vst [vmem:[%s231 + $0x70] sm:$0xf] %v723
      %852 = vst [vmem:[%s231 + $0x74] sm:$0xf] %v724
      %853 = vst [vmem:[%s231 + $0x78] sm:$0xf] %v725
      %854 = vst [vmem:[%s231 + $0x7c] sm:$0xf] %v726
      %855 = vst [vmem:[%s231 + $0x80] sm:$0xf] %v727
      %856 = vst [vmem:[%s231 + $0x84] sm:$0xf] %v728
      %857 = vst [vmem:[%s231 + $0x88] sm:$0xf] %v729
      %858 = vst [vmem:[%s231 + $0x8c] sm:$0xf] %v730
      %859 = vst [vmem:[%s231 + $0x90] sm:$0xf] %v731
      %860 = vst [vmem:[%s231 + $0x94] sm:$0xf] %v732
      %861 = vst [vmem:[%s231 + $0x98] sm:$0xf] %v733
      %862 = vst [vmem:[%s231 + $0x9c] sm:$0xf] %v734
      %863 = vst [vmem:[%s231 + $0xa0] sm:$0xf] %v735
      %864 = vst [vmem:[%s231 + $0xa4] sm:$0xf] %v736
      %865 = vst [vmem:[%s231 + $0xa8] sm:$0xf] %v737
      %866 = vst [vmem:[%s231 + $0xac] sm:$0xf] %v738
      %867 = vst [vmem:[%s231 + $0xb0] sm:$0xf] %v739
      %868 = vst [vmem:[%s231 + $0xb4] sm:$0xf] %v740
      %869 = vst [vmem:[%s231 + $0xb8] sm:$0xf] %v741
      %870 = vst [vmem:[%s231 + $0xbc] sm:$0xf] %v742
      %871 = vst [vmem:[%s231 + $0xc0] sm:$0xf] %v743
      %872 = vst [vmem:[%s231 + $0xc4] sm:$0xf] %v744
      %873 = vst [vmem:[%s231 + $0xc8] sm:$0xf] %v745
      %874 = vst [vmem:[%s231 + $0xcc] sm:$0xf] %v746
      %875 = vst [vmem:[%s231 + $0xd0] sm:$0xf] %v747
      %876 = vst [vmem:[%s231 + $0xd4] sm:$0xf] %v748
      %877 = vst [vmem:[%s231 + $0xd8] sm:$0xf] %v749
      %878 = vst [vmem:[%s231 + $0xdc] sm:$0xf] %v750
      %879 = vst [vmem:[%s231 + $0xe0] sm:$0xf] %v751
      %880 = vst [vmem:[%s231 + $0xe4] sm:$0xf] %v752
      %881 = vst [vmem:[%s231 + $0xe8] sm:$0xf] %v753
      %882 = vst [vmem:[%s231 + $0xec] sm:$0xf] %v754
      %883 = vst [vmem:[%s231 + $0xf0] sm:$0xf] %v755
      %884 = vst [vmem:[%s231 + $0xf4] sm:$0xf] %v756
      %885 = vst [vmem:[%s231 + $0xf8] sm:$0xf] %v757
      %886 = vst [vmem:[%s231 + $0xfc] sm:$0xf] %v758
      %s887 = smul.u32 64, %s18
      %p888 = scmp.lt.s32.totalorder %s887, 255
      %s889 = scalar_select %p888, %s887, 255
      %p890 = scmp.lt.s32.totalorder %s19, 0
      %s891 = scalar_select %p890, %s19, 0
      %s892 = sadd.s32 %s891, %s889
      %s893 = smul.addr %s892, 4
      %s894 = scalar_lea.vmem %s3, %s893
      // Predicated region
      $region33: #{stem_fwd.3} parent=31 // pred_check
        %p895 = pneg %p126
      $region34: #{stem_fwd.3} parent=31 // pred_check_branch
        %897 = sbr.rel (%p895) target = $region36
      $region35: #{stem_fwd.3} parent=31 // pred_region
        %s898 = smul.u32 64, %s18
      $region36: #{stem_fwd.3} parent=31 // pred_fallthru
        _
    $region32: #{stem_fwd.3} parent=5 // pred_fallthru
      _
    %p899 = scmp.le.s32.totalorder 2, %s9
    // Predicated region
    $region37: #{stem_fwd.3} parent=5 // pred_check
      %p900 = pneg %p899
    $region38: #{stem_fwd.3} parent=5 // pred_check_branch
      %902 = sbr.rel (%p900) target = $region40
    $region39: #{stem_fwd.3} parent=5 // pred_region
      %s903 = ssub.s32 %s9, 2
      // Predicated region
      $region41: #{stem_fwd.3} parent=39 // pred_check
        %p904 = pneg %p132
      $region42: #{stem_fwd.3} parent=39 // pred_check_branch
        %906 = sbr.rel (%p904) target = $region44
      $region43: #{stem_fwd.3} parent=39 // pred_region
        %s907 = smul.u32 64, %s20
        %p908 = scmp.lt.s32.totalorder %s907, 255
        %s909 = scalar_select %p908, %s907, 255
        %p910 = scmp.lt.s32.totalorder %s21, 0
        %s911 = scalar_select %p910, %s21, 0
        %s912 = sadd.s32 %s911, %s909
        %s913 = smul.addr %s912, 4
        %s914 = scalar_lea.vmem %s3, %s913
      $region44: #{stem_fwd.3} parent=39 // pred_fallthru
        _
    $region40: #{stem_fwd.3} parent=5 // pred_fallthru
      _
  $region6: #{stem_fwd.3} parent=0 // loop_footer
    %s13 = sadd.s32 1, %s9
  $region7: #{stem_fwd.3} parent=0 // loop_footer_branch
    %8 = sbr.rel target = $region3
  $region8: #{stem_fwd.3} parent=0 // loop_exit
    _

// kernel: stem_fwd.2
$region0: #{stem_fwd.2}
  #allocation0 [shape = 'u32[]', space=smem, size = 0x4, offset = 0x4, fixed_abs, tag = 'smem constant byte address 0x4 - core index']
  #allocation1 [shape = 'u32[144,128]{1,0:T(1,128)}', space=vmem, size = 0x12000, scoped, tag = 'internal scratch']
  %s0 = inlined_call_operand.vmem [shape: bf16[2048,256], index: 0, kind: input, shape index: {}]
  %s1 = inlined_call_operand.vmem [shape: bf16[256,128], index: 1, kind: input, shape index: {}]
  %s2 = inlined_call_operand.vmem [shape: bf16[2048,128], index: 2, kind: output, shape index: {0}]
  %s3 = inlined_call_operand.vmem [shape: f32[8,2,128], index: 3, kind: output, shape index: {1}]
  %4 = xla_tuple %s2, %s3
  %s5 = sld [smem:[#allocation0]]
  $region49: #{stem_fwd.2} parent=0
    _
  %s7 = ssub.s32 1, %s5
  %s8 = scalar_select 0, %s7, %s5
  loop: start=0, step=1, limit=10
  $region2: #{stem_fwd.2} parent=0 // loop_pre_header
    _
  $region3: #{stem_fwd.2} parent=0 // loop_header
    %s10 = sphi 0, %s14
    %p11 = scmp.ge.s32.totalorder %s10, 10
    %s17 = sphi 0, %s36
    %s18 = sphi 0, %s32
    %s19 = sphi 0, %s28
    %s20 = sphi 0, %s17
    %s21 = sphi 0, %s18
    %s22 = sphi 0, %s19
    %s23 = sphi 0, %s20
    %s24 = sphi 0, %s21
    %s25 = sphi 0, %s22
    %s41 = sphi 0, %s43
    %s44 = sphi 0, %s41
    %s45 = sphi 0, %s44
    %s61 = sphi 0, %s45
    %s69 = sphi 0, %s71
    %s72 = sphi 0, %s69
    %s73 = sphi 0, %s72
    %s89 = sphi 0, %s73
    %s97 = sphi 0, %s99
    %s100 = sphi 0, %s97
    %s101 = sphi 0, %s100
    %s117 = sphi 0, %s101
    %s125 = sphi 0, %s127
    %s128 = sphi 0, %s125
    %s129 = sphi 0, %s128
    %s145 = sphi 0, %s129
  $region4: #{stem_fwd.2} parent=0 // loop_header_branch
    %13 = sbr.rel (%p11) target = $region8
  $region5: #{stem_fwd.2} parent=0 // loop_body
    %s15 = ssub.s32 %s10, 1
    %s16 = ssub.s32 %s10, 2
    %s26 = sadd.s32 1, %s19
    %p27 = scmp.ge.s32.totalorder %s26, 1
    %s28 = scalar_select %p27, 0, %s26
    %s29 = sadd.s32 1, %s18
    %s30 = scalar_select %p27, %s29, %s18
    %p31 = scmp.ge.s32.totalorder %s30, 1
    %s32 = scalar_select %p31, 0, %s30
    %s33 = sadd.s32 1, %s17
    %s34 = scalar_select %p31, %s33, %s17
    %p35 = scmp.ge.s32.totalorder %s34, 8
    %s36 = scalar_select %p35, 0, %s34
    %s37 = ssub.s32 %s17, %s36
    %s38 = ssub.s32 %s19, %s28
    %s39 = sor.u32 %s37, %s38
    %p40 = scmp.eq.s32.totalorder %s39, 0
    %s42 = sadd.s32 %s41, 1
    %s43 = scalar_select %p40, %s41, %s42
    %p46 = pneg %p40
    %p47 = scmp.eq.s32.totalorder %s10, 7
    %p48 = por %p46, %p47
    %p49 = scmp.ne.s32.totalorder %s41, %s44
    %p50 = scmp.eq.s32.totalorder %s10, 0
    %p51 = por %p49, %p50
    %p52 = scmp.ne.s32.totalorder %s41, %s44
    %p53 = scmp.eq.s32.totalorder %s15, 7
    %p54 = por %p52, %p53
    %p55 = scmp.ne.s32.totalorder %s44, %s45
    %p56 = scmp.eq.s32.totalorder %s15, 0
    %p57 = por %p55, %p56
    %p58 = scmp.ne.s32.totalorder %s44, %s45
    %p59 = scmp.eq.s32.totalorder %s16, 7
    %p60 = por %p58, %p59
    %p62 = scmp.ne.s32.totalorder %s45, %s61
    %p63 = scmp.eq.s32.totalorder %s16, 0
    %p64 = por %p62, %p63
    %s65 = ssub.s32 %s19, %s28
    %s66 = ssub.s32 %s18, %s32
    %s67 = sor.u32 %s65, %s66
    %p68 = scmp.eq.s32.totalorder %s67, 0
    %s70 = sadd.s32 %s69, 1
    %s71 = scalar_select %p68, %s69, %s70
    %p74 = pneg %p68
    %p75 = scmp.eq.s32.totalorder %s10, 7
    %p76 = por %p74, %p75
    %p77 = scmp.ne.s32.totalorder %s69, %s72
    %p78 = scmp.eq.s32.totalorder %s10, 0
    %p79 = por %p77, %p78
    %p80 = scmp.ne.s32.totalorder %s69, %s72
    %p81 = scmp.eq.s32.totalorder %s15, 7
    %p82 = por %p80, %p81
    %p83 = scmp.ne.s32.totalorder %s72, %s73
    %p84 = scmp.eq.s32.totalorder %s15, 0
    %p85 = por %p83, %p84
    %p86 = scmp.ne.s32.totalorder %s72, %s73
    %p87 = scmp.eq.s32.totalorder %s16, 7
    %p88 = por %p86, %p87
    %p90 = scmp.ne.s32.totalorder %s73, %s89
    %p91 = scmp.eq.s32.totalorder %s16, 0
    %p92 = por %p90, %p91
    %s93 = ssub.s32 %s17, %s36
    %s94 = ssub.s32 %s18, %s32
    %s95 = sor.u32 %s93, %s94
    %p96 = scmp.eq.s32.totalorder %s95, 0
    %s98 = sadd.s32 %s97, 1
    %s99 = scalar_select %p96, %s97, %s98
    %p102 = pneg %p96
    %p103 = scmp.eq.s32.totalorder %s10, 7
    %p104 = por %p102, %p103
    %p105 = scmp.ne.s32.totalorder %s97, %s100
    %p106 = scmp.eq.s32.totalorder %s10, 0
    %p107 = por %p105, %p106
    %p108 = scmp.ne.s32.totalorder %s97, %s100
    %p109 = scmp.eq.s32.totalorder %s15, 7
    %p110 = por %p108, %p109
    %p111 = scmp.ne.s32.totalorder %s100, %s101
    %p112 = scmp.eq.s32.totalorder %s15, 0
    %p113 = por %p111, %p112
    %p114 = scmp.ne.s32.totalorder %s100, %s101
    %p115 = scmp.eq.s32.totalorder %s16, 7
    %p116 = por %p114, %p115
    %p118 = scmp.ne.s32.totalorder %s101, %s117
    %p119 = scmp.eq.s32.totalorder %s16, 0
    %p120 = por %p118, %p119
    %s121 = ssub.s32 %s17, %s36
    %s122 = ssub.s32 %s18, %s32
    %s123 = sor.u32 %s121, %s122
    %p124 = scmp.eq.s32.totalorder %s123, 0
    %s126 = sadd.s32 %s125, 1
    %s127 = scalar_select %p124, %s125, %s126
    %p130 = pneg %p124
    %p131 = scmp.eq.s32.totalorder %s10, 7
    %p132 = por %p130, %p131
    %p133 = scmp.ne.s32.totalorder %s125, %s128
    %p134 = scmp.eq.s32.totalorder %s10, 0
    %p135 = por %p133, %p134
    %p136 = scmp.ne.s32.totalorder %s125, %s128
    %p137 = scmp.eq.s32.totalorder %s15, 7
    %p138 = por %p136, %p137
    %p139 = scmp.ne.s32.totalorder %s128, %s129
    %p140 = scmp.eq.s32.totalorder %s15, 0
    %p141 = por %p139, %p140
    %p142 = scmp.ne.s32.totalorder %s128, %s129
    %p143 = scmp.eq.s32.totalorder %s16, 7
    %p144 = por %p142, %p143
    %p146 = scmp.ne.s32.totalorder %s129, %s145
    %p147 = scmp.eq.s32.totalorder %s16, 0
    %p148 = por %p146, %p147
    %p149 = scmp.le.s32.totalorder 1, %s10
    %p150 = scmp.lt.s32.totalorder %s10, 9
    %p151 = pnand %p149, %p150
    %p152 = pneg %p151
    // Predicated region
    $region9: #{stem_fwd.2} parent=5 // pred_check
      _
    $region10: #{stem_fwd.2} parent=5 // pred_check_branch
      %154 = sbr.rel (%p151) target = $region12
    $region11: #{stem_fwd.2} parent=5 // pred_region
      %s155 = ssub.s32 %s10, 1
      // Predicated region
      $region13: #{stem_fwd.2} parent=11 // pred_check
        %p156 = pneg %p85
      $region14: #{stem_fwd.2} parent=11 // pred_check_branch
        %158 = sbr.rel (%p156) target = $region16
      $region15: #{stem_fwd.2} parent=11 // pred_region
        %s159 = smul.u32 32, %s22
        %p160 = scmp.lt.s32.totalorder %s159, 31
        %s161 = scalar_select %p160, %s159, 31
        %p162 = scmp.lt.s32.totalorder %s21, 0
        %s163 = scalar_select %p162, %s21, 0
        %s164 = sadd.s32 %s163, %s161
        %s165 = smul.addr %s164, 4
        %s166 = scalar_lea.vmem %s1, %s165
        %s167 = smul.u32 32, %s22
      $region16: #{stem_fwd.2} parent=11 // pred_fallthru
        _
    $region12: #{stem_fwd.2} parent=5 // pred_fallthru
      _
    %p168 = scmp.lt.s32.totalorder %s10, 8
    // Predicated region
    $region17: #{stem_fwd.2} parent=5 // pred_check
      %p169 = pneg %p168
    $region18: #{stem_fwd.2} parent=5 // pred_check_branch
      %171 = sbr.rel (%p169) target = $region20
    $region19: #{stem_fwd.2} parent=5 // pred_region
      // Predicated region
      $region21: #{stem_fwd.2} parent=19 // pred_check
        %p172 = pneg %p51
      $region22: #{stem_fwd.2} parent=19 // pred_check_branch
        %174 = sbr.rel (%p172) target = $region24
      $region23: #{stem_fwd.2} parent=19 // pred_region
        %s175 = smul.u32 32, %s17
        %s176 = smul.u32 2, %s19
        %p177 = scmp.lt.s32.totalorder %s175, 255
        %s178 = scalar_select %p177, %s175, 255
        %p179 = scmp.lt.s32.totalorder %s176, 1
        %s180 = scalar_select %p179, %s176, 1
        %s181 = smul.addr %s178, 2
        %s182 = sadd.s32 %s180, %s181
        %s183 = smul.addr %s182, 4
        %s184 = scalar_lea.vmem %s0, %s183
        %s185 = smul.u32 32, %s17
        %s186 = smul.u32 2, %s19
      $region24: #{stem_fwd.2} parent=19 // pred_fallthru
        _
    $region20: #{stem_fwd.2} parent=5 // pred_fallthru
      _
    %p187 = scmp.le.s32.totalorder 1, %s10
    %p188 = scmp.lt.s32.totalorder %s10, 9
    %p189 = pnand %p187, %p188
    %p190 = pneg %p189
    // Predicated region
    $region25: #{stem_fwd.2} parent=5 // pred_check
      _
    $region26: #{stem_fwd.2} parent=5 // pred_check_branch
      %192 = sbr.rel (%p189) target = $region28
    $region27: #{stem_fwd.2} parent=5 // pred_region
      %s193 = ssub.s32 %s10, 1
      %s194 = smul.u32 32, %s20
      %s195 = smul.u32 2, %s22
      %p196 = scmp.lt.s32.totalorder %s194, 255
      %s197 = scalar_select %p196, %s194, 255
      %p198 = scmp.lt.s32.totalorder %s195, 1
      %s199 = scalar_select %p198, %s195, 1
      %s200 = smul.addr %s197, 2
      %s201 = sadd.s32 %s199, %s200
      %s202 = smul.addr %s201, 4
      %s203 = scalar_lea.vmem %s0, %s202
      %p204 = pneg %p57
      %p205 = pneg %p54
      %s206 = smul.u32 32, %s22
      %p207 = scmp.lt.s32.totalorder %s206, 31
      %s208 = scalar_select %p207, %s206, 31
      %p209 = scmp.lt.s32.totalorder %s21, 0
      %s210 = scalar_select %p209, %s21, 0
      %s211 = sadd.s32 %s210, %s208
      %s212 = smul.addr %s211, 4
      %s213 = scalar_lea.vmem %s1, %s212
      %p214 = pneg %p85
      %p215 = pneg %p82
      %p216 = pneg %p113
      %p217 = pneg %p110
      %s218 = smul.u32 32, %s20
      %p219 = scmp.lt.s32.totalorder %s218, 255
      %s220 = scalar_select %p219, %s218, 255
      %p221 = scmp.lt.s32.totalorder %s21, 0
      %s222 = scalar_select %p221, %s21, 0
      %s223 = sadd.s32 %s222, %s220
      %s224 = smul.addr %s223, 4
      %s225 = scalar_lea.vmem %s2, %s224
      %p226 = pneg %p141
      %p227 = pneg %p138
      %p228 = scmp.lt.s32.totalorder %s20, 7
      %s229 = scalar_select %p228, %s20, 7
      %p230 = scmp.lt.s32.totalorder %s21, 0
      %s231 = scalar_select %p230, %s21, 0
      %s232 = sadd.s32 %s231, %s229
      %s233 = smul.addr %s232, 2
      %s234 = scalar_lea.vmem %s3, %s233
      %s235 = smul.u32 32, %s20
      %s236 = smul.u32 2, %s22
      %p237 = scmp.lt.s32.totalorder %s235, 255
      %s238 = scalar_select %p237, %s235, 255
      %p239 = scmp.lt.s32.totalorder %s236, 1
      %s240 = scalar_select %p239, %s236, 1
      %s241 = smul.addr %s238, 2
      %s242 = sadd.s32 %s240, %s241
      %s243 = smul.addr %s242, 4
      %s244 = scalar_lea.vmem %s0, %s243
      %s245 = smul.u32 32, %s20
      %s246 = smul.u32 2, %s22
      %s247 = smul.u32 32, %s22
      %p248 = scmp.lt.s32.totalorder %s247, 31
      %s249 = scalar_select %p248, %s247, 31
      %p250 = scmp.lt.s32.totalorder %s21, 0
      %s251 = scalar_select %p250, %s21, 0
      %s252 = sadd.s32 %s251, %s249
      %s253 = smul.addr %s252, 4
      %s254 = scalar_lea.vmem %s1, %s253
      %s255 = smul.u32 32, %s22
      %s256 = smul.u32 32, %s20
      %p257 = scmp.lt.s32.totalorder %s256, 255
      %s258 = scalar_select %p257, %s256, 255
      %p259 = scmp.lt.s32.totalorder %s21, 0
      %s260 = scalar_select %p259, %s21, 0
      %s261 = sadd.s32 %s260, %s258
      %s262 = smul.addr %s261, 4
      %s263 = scalar_lea.vmem %s2, %s262
      %s264 = smul.u32 32, %s20
      %p265 = scmp.lt.s32.totalorder %s20, 7
      %s266 = scalar_select %p265, %s20, 7
      %p267 = scmp.lt.s32.totalorder %s21, 0
      %s268 = scalar_select %p267, %s21, 0
      %s269 = sadd.s32 %s268, %s266
      %s270 = smul.addr %s269, 2
      %s271 = scalar_lea.vmem %s3, %s270
      %v273 = vld [vmem:[%s244] sm:$0xff]
      %v274 = vld [vmem:[%s244 + $0x8] sm:$0xff]
      %v275 = vld [vmem:[%s244 + $0x10] sm:$0xff]
      %v276 = vld [vmem:[%s244 + $0x18] sm:$0xff]
      %v277 = vld [vmem:[%s244 + $0x20] sm:$0xff]
      %v278 = vld [vmem:[%s244 + $0x28] sm:$0xff]
      %v279 = vld [vmem:[%s244 + $0x30] sm:$0xff]
      %v280 = vld [vmem:[%s244 + $0x38] sm:$0xff]
      %v281 = vld [vmem:[%s244 + $0x40] sm:$0xff]
      %v282 = vld [vmem:[%s244 + $0x48] sm:$0xff]
      %v283 = vld [vmem:[%s244 + $0x50] sm:$0xff]
      %v284 = vld [vmem:[%s244 + $0x58] sm:$0xff]
      %v285 = vld [vmem:[%s244 + $0x60] sm:$0xff]
      %v286 = vld [vmem:[%s244 + $0x68] sm:$0xff]
      %v287 = vld [vmem:[%s244 + $0x70] sm:$0xff]
      %v288 = vld [vmem:[%s244 + $0x78] sm:$0xff]
      %v289 = vld [vmem:[%s244 + $0x80] sm:$0xff]
      %v290 = vld [vmem:[%s244 + $0x88] sm:$0xff]
      %v291 = vld [vmem:[%s244 + $0x90] sm:$0xff]
      %v292 = vld [vmem:[%s244 + $0x98] sm:$0xff]
      %v293 = vld [vmem:[%s244 + $0xa0] sm:$0xff]
      %v294 = vld [vmem:[%s244 + $0xa8] sm:$0xff]
      %v295 = vld [vmem:[%s244 + $0xb0] sm:$0xff]
      %v296 = vld [vmem:[%s244 + $0xb8] sm:$0xff]
      %v297 = vld [vmem:[%s244 + $0xc0] sm:$0xff]
      %v298 = vld [vmem:[%s244 + $0xc8] sm:$0xff]
      %v299 = vld [vmem:[%s244 + $0xd0] sm:$0xff]
      %v300 = vld [vmem:[%s244 + $0xd8] sm:$0xff]
      %v301 = vld [vmem:[%s244 + $0xe0] sm:$0xff]
      %v302 = vld [vmem:[%s244 + $0xe8] sm:$0xff]
      %v303 = vld [vmem:[%s244 + $0xf0] sm:$0xff]
      %v304 = vld [vmem:[%s244 + $0xf8] sm:$0xff]
      %v305 = vld [vmem:[%s254] sm:$0xf]
      %v306 = vld [vmem:[%s254 + $0x4] sm:$0xf]
      %v307 = vld [vmem:[%s254 + $0x8] sm:$0xf]
      %v308 = vld [vmem:[%s254 + $0xc] sm:$0xf]
      %v309 = vld [vmem:[%s254 + $0x10] sm:$0xf]
      %v310 = vld [vmem:[%s254 + $0x14] sm:$0xf]
      %v311 = vld [vmem:[%s254 + $0x18] sm:$0xf]
      %v312 = vld [vmem:[%s254 + $0x1c] sm:$0xf]
      %v313 = vld [vmem:[%s254 + $0x20] sm:$0xf]
      %v314 = vld [vmem:[%s254 + $0x24] sm:$0xf]
      %v315 = vld [vmem:[%s254 + $0x28] sm:$0xf]
      %v316 = vld [vmem:[%s254 + $0x2c] sm:$0xf]
      %v317 = vld [vmem:[%s254 + $0x30] sm:$0xf]
      %v318 = vld [vmem:[%s254 + $0x34] sm:$0xf]
      %v319 = vld [vmem:[%s254 + $0x38] sm:$0xf]
      %v320 = vld [vmem:[%s254 + $0x3c] sm:$0xf]
      %v321 = vld [vmem:[%s254 + $0x40] sm:$0xf]
      %v322 = vld [vmem:[%s254 + $0x44] sm:$0xf]
      %v323 = vld [vmem:[%s254 + $0x48] sm:$0xf]
      %v324 = vld [vmem:[%s254 + $0x4c] sm:$0xf]
      %v325 = vld [vmem:[%s254 + $0x50] sm:$0xf]
      %v326 = vld [vmem:[%s254 + $0x54] sm:$0xf]
      %v327 = vld [vmem:[%s254 + $0x58] sm:$0xf]
      %v328 = vld [vmem:[%s254 + $0x5c] sm:$0xf]
      %v329 = vld [vmem:[%s254 + $0x60] sm:$0xf]
      %v330 = vld [vmem:[%s254 + $0x64] sm:$0xf]
      %v331 = vld [vmem:[%s254 + $0x68] sm:$0xf]
      %v332 = vld [vmem:[%s254 + $0x6c] sm:$0xf]
      %v333 = vld [vmem:[%s254 + $0x70] sm:$0xf]
      %v334 = vld [vmem:[%s254 + $0x74] sm:$0xf]
      %v335 = vld [vmem:[%s254 + $0x78] sm:$0xf]
      %v336 = vld [vmem:[%s254 + $0x7c] sm:$0xf]
      %v369 = vunpack.c.l.b16 %v273
      %v370 = vunpack.c.h.b16 %v273
      %v371 = vunpack.c.l.b16 %v274
      %v372 = vunpack.c.h.b16 %v274
      %v373 = vunpack.c.l.b16 %v275
      %v374 = vunpack.c.h.b16 %v275
      %v375 = vunpack.c.l.b16 %v276
      %v376 = vunpack.c.h.b16 %v276
      %v377 = vunpack.c.l.b16 %v277
      %v378 = vunpack.c.h.b16 %v277
      %v379 = vunpack.c.l.b16 %v278
      %v380 = vunpack.c.h.b16 %v278
      %v381 = vunpack.c.l.b16 %v279
      %v382 = vunpack.c.h.b16 %v279
      %v383 = vunpack.c.l.b16 %v280
      %v384 = vunpack.c.h.b16 %v280
      %v385 = vunpack.c.l.b16 %v281
      %v386 = vunpack.c.h.b16 %v281
      %v387 = vunpack.c.l.b16 %v282
      %v388 = vunpack.c.h.b16 %v282
      %v389 = vunpack.c.l.b16 %v283
      %v390 = vunpack.c.h.b16 %v283
      %v391 = vunpack.c.l.b16 %v284
      %v392 = vunpack.c.h.b16 %v284
      %v393 = vunpack.c.l.b16 %v285
      %v394 = vunpack.c.h.b16 %v285
      %v395 = vunpack.c.l.b16 %v286
      %v396 = vunpack.c.h.b16 %v286
      %v397 = vunpack.c.l.b16 %v287
      %v398 = vunpack.c.h.b16 %v287
      %v399 = vunpack.c.l.b16 %v288
      %v400 = vunpack.c.h.b16 %v288
      %v401 = vunpack.c.l.b16 %v289
      %v402 = vunpack.c.h.b16 %v289
      %v403 = vunpack.c.l.b16 %v290
      %v404 = vunpack.c.h.b16 %v290
      %v405 = vunpack.c.l.b16 %v291
      %v406 = vunpack.c.h.b16 %v291
      %v407 = vunpack.c.l.b16 %v292
      %v408 = vunpack.c.h.b16 %v292
      %v409 = vunpack.c.l.b16 %v293
      %v410 = vunpack.c.h.b16 %v293
      %v411 = vunpack.c.l.b16 %v294
      %v412 = vunpack.c.h.b16 %v294
      %v413 = vunpack.c.l.b16 %v295
      %v414 = vunpack.c.h.b16 %v295
      %v415 = vunpack.c.l.b16 %v296
      %v416 = vunpack.c.h.b16 %v296
      %v417 = vunpack.c.l.b16 %v297
      %v418 = vunpack.c.h.b16 %v297
      %v419 = vunpack.c.l.b16 %v298
      %v420 = vunpack.c.h.b16 %v298
      %v421 = vunpack.c.l.b16 %v299
      %v422 = vunpack.c.h.b16 %v299
      %v423 = vunpack.c.l.b16 %v300
      %v424 = vunpack.c.h.b16 %v300
      %v425 = vunpack.c.l.b16 %v301
      %v426 = vunpack.c.h.b16 %v301
      %v427 = vunpack.c.l.b16 %v302
      %v428 = vunpack.c.h.b16 %v302
      %v429 = vunpack.c.l.b16 %v303
      %v430 = vunpack.c.h.b16 %v303
      %v431 = vunpack.c.l.b16 %v304
      %v432 = vunpack.c.h.b16 %v304
      %v433 = vpack.c.b16 %v371, %v369
      %v434 = vpack.c.b16 %v372, %v370
      %v435 = vpack.c.b16 %v375, %v373
      %v436 = vpack.c.b16 %v376, %v374
      %v437 = vpack.c.b16 %v379, %v377
      %v438 = vpack.c.b16 %v380, %v378
      %v439 = vpack.c.b16 %v383, %v381
      %v440 = vpack.c.b16 %v384, %v382
      %v441 = vpack.c.b16 %v387, %v385
      %v442 = vpack.c.b16 %v388, %v386
      %v443 = vpack.c.b16 %v391, %v389
      %v444 = vpack.c.b16 %v392, %v390
      %v445 = vpack.c.b16 %v395, %v393
      %v446 = vpack.c.b16 %v396, %v394
      %v447 = vpack.c.b16 %v399, %v397
      %v448 = vpack.c.b16 %v400, %v398
      %v449 = vpack.c.b16 %v403, %v401
      %v450 = vpack.c.b16 %v404, %v402
      %v451 = vpack.c.b16 %v407, %v405
      %v452 = vpack.c.b16 %v408, %v406
      %v453 = vpack.c.b16 %v411, %v409
      %v454 = vpack.c.b16 %v412, %v410
      %v455 = vpack.c.b16 %v415, %v413
      %v456 = vpack.c.b16 %v416, %v414
      %v457 = vpack.c.b16 %v419, %v417
      %v458 = vpack.c.b16 %v420, %v418
      %v459 = vpack.c.b16 %v423, %v421
      %v460 = vpack.c.b16 %v424, %v422
      %v461 = vpack.c.b16 %v427, %v425
      %v462 = vpack.c.b16 %v428, %v426
      %v463 = vpack.c.b16 %v431, %v429
      %v464 = vpack.c.b16 %v432, %v430
      %v529 = vunpack.c.l.b16 %v305
      %v530 = vunpack.c.l.b16 %v306
      %v531 = vunpack.c.l.b16 %v307
      %v532 = vunpack.c.l.b16 %v308
      %v533 = vunpack.c.l.b16 %v309
      %v534 = vunpack.c.l.b16 %v310
      %v535 = vunpack.c.l.b16 %v311
      %v536 = vunpack.c.l.b16 %v312
      %v537 = vunpack.c.l.b16 %v313
      %v538 = vunpack.c.l.b16 %v314
      %v539 = vunpack.c.l.b16 %v315
      %v540 = vunpack.c.l.b16 %v316
      %v541 = vunpack.c.l.b16 %v317
      %v542 = vunpack.c.l.b16 %v318
      %v543 = vunpack.c.l.b16 %v319
      %v544 = vunpack.c.l.b16 %v320
      %v545 = vunpack.c.l.b16 %v321
      %v546 = vunpack.c.l.b16 %v322
      %v547 = vunpack.c.l.b16 %v323
      %v548 = vunpack.c.l.b16 %v324
      %v549 = vunpack.c.l.b16 %v325
      %v550 = vunpack.c.l.b16 %v326
      %v551 = vunpack.c.l.b16 %v327
      %v552 = vunpack.c.l.b16 %v328
      %v553 = vunpack.c.l.b16 %v329
      %v554 = vunpack.c.l.b16 %v330
      %v555 = vunpack.c.l.b16 %v331
      %v556 = vunpack.c.l.b16 %v332
      %v557 = vunpack.c.l.b16 %v333
      %v558 = vunpack.c.l.b16 %v334
      %v559 = vunpack.c.l.b16 %v335
      %v560 = vunpack.c.l.b16 %v336
      %v561 = vpack.c.b16 %v530, %v529
      %v562 = vpack.c.b16 %v532, %v531
      %v563 = vpack.c.b16 %v534, %v533
      %v564 = vpack.c.b16 %v536, %v535
      %v565 = vpack.c.b16 %v538, %v537
      %v566 = vpack.c.b16 %v540, %v539
      %v567 = vpack.c.b16 %v542, %v541
      %v568 = vpack.c.b16 %v544, %v543
      %v569 = vpack.c.b16 %v546, %v545
      %v570 = vpack.c.b16 %v548, %v547
      %v571 = vpack.c.b16 %v550, %v549
      %v572 = vpack.c.b16 %v552, %v551
      %v573 = vpack.c.b16 %v554, %v553
      %v574 = vpack.c.b16 %v556, %v555
      %v575 = vpack.c.b16 %v558, %v557
      %v576 = vpack.c.b16 %v560, %v559
      %593 = vmatprep.subr.bf16.mxu0 0
      %594 = vmatpush1.bf16.msra.mxu0 %v568
      %595 = vmatprep.subr.bf16.mxu0 0
      %596 = vmatpush1.bf16.msra.mxu0 %v567
      %597 = vmatprep.subr.bf16.mxu0 0
      %598 = vmatpush1.bf16.msra.mxu0 %v566
      %599 = vmatprep.subr.bf16.mxu0 0
      %600 = vmatpush1.bf16.msra.mxu0 %v565
      %601 = vmatprep.subr.bf16.mxu0 0
      %602 = vmatpush1.bf16.msra.mxu0 %v564
      %603 = vmatprep.subr.bf16.mxu0 0
      %604 = vmatpush1.bf16.msra.mxu0 %v563
      %605 = vmatprep.subr.bf16.mxu0 0
      %606 = vmatpush1.bf16.msra.mxu0 %v562
      %607 = vmatprep.subr.bf16.mxu0 0
      %608 = vmatpush1.bf16.msra.mxu0 %v561
      %609 = vmatprep.subr.bf16.mxu0 0
      %610 = vmatpush2.bf16.msra.mxu0 %v576
      %611 = vmatprep.subr.bf16.mxu0 0
      %612 = vmatpush2.bf16.msra.mxu0 %v575
      %613 = vmatprep.subr.bf16.mxu0 0
      %614 = vmatpush2.bf16.msra.mxu0 %v574
      %615 = vmatprep.subr.bf16.mxu0 0
      %616 = vmatpush2.bf16.msra.mxu0 %v573
      %617 = vmatprep.subr.bf16.mxu0 0
      %618 = vmatpush2.bf16.msra.mxu0 %v572
      %619 = vmatprep.subr.bf16.mxu0 0
      %620 = vmatpush2.bf16.msra.mxu0 %v571
      %621 = vmatprep.subr.bf16.mxu0 0
      %622 = vmatpush2.bf16.msra.mxu0 %v570
      %623 = vmatprep.subr.bf16.mxu0 0
      %624 = vmatpush2.bf16.msra.mxu0 %v569
      %625 = vmatprep.mubr.bf16.mxu0 %v434
      %626 = vmatmul.mubr.bf16.gmra.mxu0 %v433
      %v627 = vpop.f32.mrf.mxu0
      %v628 = vadd.f32 0.0, %v627
      %v629 = vpop.f32.mrf.mxu0
      %v630 = vpop.f32.mrf.mxu0
      %v631 = vadd.f32 0.0, %v630
      %v632 = vpop.f32.mrf.mxu0
      %633 = vmatprep.mubr.bf16.mxu0 %v436
      %634 = vmatmul.mubr.bf16.gmra.mxu0 %v435
      %v635 = vpop.f32.mrf.mxu0
      %v636 = vadd.f32 0.0, %v635
      %v637 = vpop.f32.mrf.mxu0
      %v638 = vpop.f32.mrf.mxu0
      %v639 = vadd.f32 0.0, %v638
      %v640 = vpop.f32.mrf.mxu0
      %641 = vmatprep.mubr.bf16.mxu0 %v438
      %642 = vmatmul.mubr.bf16.gmra.mxu0 %v437
      %v643 = vpop.f32.mrf.mxu0
      %v644 = vadd.f32 0.0, %v643
      %v645 = vpop.f32.mrf.mxu0
      %v646 = vpop.f32.mrf.mxu0
      %v647 = vadd.f32 0.0, %v646
      %v648 = vpop.f32.mrf.mxu0
      %649 = vmatprep.mubr.bf16.mxu0 %v440
      %650 = vmatmul.mubr.bf16.gmra.mxu0 %v439
      %v651 = vpop.f32.mrf.mxu0
      %v652 = vadd.f32 0.0, %v651
      %v653 = vpop.f32.mrf.mxu0
      %v654 = vpop.f32.mrf.mxu0
      %v655 = vadd.f32 0.0, %v654
      %v656 = vpop.f32.mrf.mxu0
      %657 = vmatprep.mubr.bf16.mxu0 %v442
      %658 = vmatmul.mubr.bf16.gmra.mxu0 %v441
      %v659 = vpop.f32.mrf.mxu0
      %v660 = vadd.f32 0.0, %v659
      %v661 = vpop.f32.mrf.mxu0
      %v662 = vpop.f32.mrf.mxu0
      %v663 = vadd.f32 0.0, %v662
      %v664 = vpop.f32.mrf.mxu0
      %665 = vmatprep.mubr.bf16.mxu0 %v444
      %666 = vmatmul.mubr.bf16.gmra.mxu0 %v443
      %v667 = vpop.f32.mrf.mxu0
      %v668 = vadd.f32 0.0, %v667
      %v669 = vpop.f32.mrf.mxu0
      %v670 = vpop.f32.mrf.mxu0
      %v671 = vadd.f32 0.0, %v670
      %v672 = vpop.f32.mrf.mxu0
      %673 = vmatprep.mubr.bf16.mxu0 %v446
      %674 = vmatmul.mubr.bf16.gmra.mxu0 %v445
      %v675 = vpop.f32.mrf.mxu0
      %v676 = vadd.f32 0.0, %v675
      %v677 = vpop.f32.mrf.mxu0
      %v678 = vpop.f32.mrf.mxu0
      %v679 = vadd.f32 0.0, %v678
      %v680 = vpop.f32.mrf.mxu0
      %681 = vmatprep.mubr.bf16.mxu0 %v448
      %682 = vmatmul.mubr.bf16.gmra.mxu0 %v447
      %v683 = vpop.f32.mrf.mxu0
      %v684 = vadd.f32 0.0, %v683
      %v685 = vpop.f32.mrf.mxu0
      %v686 = vpop.f32.mrf.mxu0
      %v687 = vadd.f32 0.0, %v686
      %v688 = vpop.f32.mrf.mxu0
      %689 = vmatprep.mubr.bf16.mxu0 %v450
      %690 = vmatmul.mubr.bf16.gmra.mxu0 %v449
      %v691 = vpop.f32.mrf.mxu0
      %v692 = vadd.f32 0.0, %v691
      %v693 = vpop.f32.mrf.mxu0
      %v694 = vpop.f32.mrf.mxu0
      %v695 = vadd.f32 0.0, %v694
      %v696 = vpop.f32.mrf.mxu0
      %697 = vmatprep.mubr.bf16.mxu0 %v452
      %698 = vmatmul.mubr.bf16.gmra.mxu0 %v451
      %v699 = vpop.f32.mrf.mxu0
      %v700 = vadd.f32 0.0, %v699
      %v701 = vpop.f32.mrf.mxu0
      %v702 = vpop.f32.mrf.mxu0
      %v703 = vadd.f32 0.0, %v702
      %v704 = vpop.f32.mrf.mxu0
      %705 = vmatprep.mubr.bf16.mxu0 %v454
      %706 = vmatmul.mubr.bf16.gmra.mxu0 %v453
      %v707 = vpop.f32.mrf.mxu0
      %v708 = vadd.f32 0.0, %v707
      %v709 = vpop.f32.mrf.mxu0
      %v710 = vpop.f32.mrf.mxu0
      %v711 = vadd.f32 0.0, %v710
      %v712 = vpop.f32.mrf.mxu0
      %713 = vmatprep.mubr.bf16.mxu0 %v456
      %714 = vmatmul.mubr.bf16.gmra.mxu0 %v455
      %v715 = vpop.f32.mrf.mxu0
      %v716 = vadd.f32 0.0, %v715
      %v717 = vpop.f32.mrf.mxu0
      %v718 = vpop.f32.mrf.mxu0
      %v719 = vadd.f32 0.0, %v718
      %v720 = vpop.f32.mrf.mxu0
      %721 = vmatprep.mubr.bf16.mxu0 %v458
      %722 = vmatmul.mubr.bf16.gmra.mxu0 %v457
      %v723 = vpop.f32.mrf.mxu0
      %v724 = vadd.f32 0.0, %v723
      %v725 = vpop.f32.mrf.mxu0
      %v726 = vpop.f32.mrf.mxu0
      %v727 = vadd.f32 0.0, %v726
      %v728 = vpop.f32.mrf.mxu0
      %729 = vmatprep.mubr.bf16.mxu0 %v460
      %730 = vmatmul.mubr.bf16.gmra.mxu0 %v459
      %v731 = vpop.f32.mrf.mxu0
      %v732 = vadd.f32 0.0, %v731
      %v733 = vpop.f32.mrf.mxu0
      %v734 = vpop.f32.mrf.mxu0
      %v735 = vadd.f32 0.0, %v734
      %v736 = vpop.f32.mrf.mxu0
      %737 = vmatprep.mubr.bf16.mxu0 %v462
      %738 = vmatmul.mubr.bf16.gmra.mxu0 %v461
      %v739 = vpop.f32.mrf.mxu0
      %v740 = vadd.f32 0.0, %v739
      %v741 = vpop.f32.mrf.mxu0
      %v742 = vpop.f32.mrf.mxu0
      %v743 = vadd.f32 0.0, %v742
      %v744 = vpop.f32.mrf.mxu0
      %745 = vmatprep.mubr.bf16.mxu0 %v464
      %746 = vmatmul.mubr.bf16.gmra.mxu0 %v463
      %v747 = vpop.f32.mrf.mxu0
      %v748 = vadd.f32 0.0, %v747
      %v749 = vpop.f32.mrf.mxu0
      %v750 = vpop.f32.mrf.mxu0
      %v751 = vadd.f32 0.0, %v750
      %v752 = vpop.f32.mrf.mxu0
      %753 = vdwg.mxu0
      %v754 = vpack.c.bf16 %v631, %v628
      %v755 = vpack.c.bf16 %v639, %v636
      %v756 = vpack.c.bf16 %v647, %v644
      %v757 = vpack.c.bf16 %v655, %v652
      %v758 = vpack.c.bf16 %v663, %v660
      %v759 = vpack.c.bf16 %v671, %v668
      %v760 = vpack.c.bf16 %v679, %v676
      %v761 = vpack.c.bf16 %v687, %v684
      %v762 = vpack.c.bf16 %v695, %v692
      %v763 = vpack.c.bf16 %v703, %v700
      %v764 = vpack.c.bf16 %v711, %v708
      %v765 = vpack.c.bf16 %v719, %v716
      %v766 = vpack.c.bf16 %v727, %v724
      %v767 = vpack.c.bf16 %v735, %v732
      %v768 = vpack.c.bf16 %v743, %v740
      %v769 = vpack.c.bf16 %v751, %v748
      %v786 = vunpack.c.l.b16 %v754
      %v787 = vunpack.c.h.b16 %v754
      %v788 = vunpack.c.l.b16 %v755
      %v789 = vunpack.c.h.b16 %v755
      %v790 = vunpack.c.l.b16 %v756
      %v791 = vunpack.c.h.b16 %v756
      %v792 = vunpack.c.l.b16 %v757
      %v793 = vunpack.c.h.b16 %v757
      %v794 = vunpack.c.l.b16 %v758
      %v795 = vunpack.c.h.b16 %v758
      %v796 = vunpack.c.l.b16 %v759
      %v797 = vunpack.c.h.b16 %v759
      %v798 = vunpack.c.l.b16 %v760
      %v799 = vunpack.c.h.b16 %v760
      %v800 = vunpack.c.l.b16 %v761
      %v801 = vunpack.c.h.b16 %v761
      %v802 = vunpack.c.l.b16 %v762
      %v803 = vunpack.c.h.b16 %v762
      %v804 = vunpack.c.l.b16 %v763
      %v805 = vunpack.c.h.b16 %v763
      %v806 = vunpack.c.l.b16 %v764
      %v807 = vunpack.c.h.b16 %v764
      %v808 = vunpack.c.l.b16 %v765
      %v809 = vunpack.c.h.b16 %v765
      %v810 = vunpack.c.l.b16 %v766
      %v811 = vunpack.c.h.b16 %v766
      %v812 = vunpack.c.l.b16 %v767
      %v813 = vunpack.c.h.b16 %v767
      %v814 = vunpack.c.l.b16 %v768
      %v815 = vunpack.c.h.b16 %v768
      %v816 = vunpack.c.l.b16 %v769
      %v817 = vunpack.c.h.b16 %v769
      %v818 = vpack.c.b16 %v786, %v786
      %v819 = vpack.c.b16 %v787, %v787
      %v820 = vpack.c.b16 %v788, %v788
      %v821 = vpack.c.b16 %v789, %v789
      %v822 = vpack.c.b16 %v790, %v790
      %v823 = vpack.c.b16 %v791, %v791
      %v824 = vpack.c.b16 %v792, %v792
      %v825 = vpack.c.b16 %v793, %v793
      %v826 = vpack.c.b16 %v794, %v794
      %v827 = vpack.c.b16 %v795, %v795
      %v828 = vpack.c.b16 %v796, %v796
      %v829 = vpack.c.b16 %v797, %v797
      %v830 = vpack.c.b16 %v798, %v798
      %v831 = vpack.c.b16 %v799, %v799
      %v832 = vpack.c.b16 %v800, %v800
      %v833 = vpack.c.b16 %v801, %v801
      %v834 = vpack.c.b16 %v802, %v802
      %v835 = vpack.c.b16 %v803, %v803
      %v836 = vpack.c.b16 %v804, %v804
      %v837 = vpack.c.b16 %v805, %v805
      %v838 = vpack.c.b16 %v806, %v806
      %v839 = vpack.c.b16 %v807, %v807
      %v840 = vpack.c.b16 %v808, %v808
      %v841 = vpack.c.b16 %v809, %v809
      %v842 = vpack.c.b16 %v810, %v810
      %v843 = vpack.c.b16 %v811, %v811
      %v844 = vpack.c.b16 %v812, %v812
      %v845 = vpack.c.b16 %v813, %v813
      %v846 = vpack.c.b16 %v814, %v814
      %v847 = vpack.c.b16 %v815, %v815
      %v848 = vpack.c.b16 %v816, %v816
      %v849 = vpack.c.b16 %v817, %v817
      %882 = vst [vmem:[%s263] sm:$0xf] %v818
      %883 = vst [vmem:[%s263 + $0x4] sm:$0xf] %v819
      %884 = vst [vmem:[%s263 + $0x8] sm:$0xf] %v820
      %885 = vst [vmem:[%s263 + $0xc] sm:$0xf] %v821
      %886 = vst [vmem:[%s263 + $0x10] sm:$0xf] %v822
      %887 = vst [vmem:[%s263 + $0x14] sm:$0xf] %v823
      %888 = vst [vmem:[%s263 + $0x18] sm:$0xf] %v824
      %889 = vst [vmem:[%s263 + $0x1c] sm:$0xf] %v825
      %890 = vst [vmem:[%s263 + $0x20] sm:$0xf] %v826
      %891 = vst [vmem:[%s263 + $0x24] sm:$0xf] %v827
      %892 = vst [vmem:[%s263 + $0x28] sm:$0xf] %v828
      %893 = vst [vmem:[%s263 + $0x2c] sm:$0xf] %v829
      %894 = vst [vmem:[%s263 + $0x30] sm:$0xf] %v830
      %895 = vst [vmem:[%s263 + $0x34] sm:$0xf] %v831
      %896 = vst [vmem:[%s263 + $0x38] sm:$0xf] %v832
      %897 = vst [vmem:[%s263 + $0x3c] sm:$0xf] %v833
      %898 = vst [vmem:[%s263 + $0x40] sm:$0xf] %v834
      %899 = vst [vmem:[%s263 + $0x44] sm:$0xf] %v835
      %900 = vst [vmem:[%s263 + $0x48] sm:$0xf] %v836
      %901 = vst [vmem:[%s263 + $0x4c] sm:$0xf] %v837
      %902 = vst [vmem:[%s263 + $0x50] sm:$0xf] %v838
      %903 = vst [vmem:[%s263 + $0x54] sm:$0xf] %v839
      %904 = vst [vmem:[%s263 + $0x58] sm:$0xf] %v840
      %905 = vst [vmem:[%s263 + $0x5c] sm:$0xf] %v841
      %906 = vst [vmem:[%s263 + $0x60] sm:$0xf] %v842
      %907 = vst [vmem:[%s263 + $0x64] sm:$0xf] %v843
      %908 = vst [vmem:[%s263 + $0x68] sm:$0xf] %v844
      %909 = vst [vmem:[%s263 + $0x6c] sm:$0xf] %v845
      %910 = vst [vmem:[%s263 + $0x70] sm:$0xf] %v846
      %911 = vst [vmem:[%s263 + $0x74] sm:$0xf] %v847
      %912 = vst [vmem:[%s263 + $0x78] sm:$0xf] %v848
      %913 = vst [vmem:[%s263 + $0x7c] sm:$0xf] %v849
      %v914 = vadd.f32 %v628, %v631
      %v915 = vadd.f32 %v914, %v636
      %v916 = vadd.f32 %v915, %v639
      %v917 = vadd.f32 %v916, %v644
      %v918 = vadd.f32 %v917, %v647
      %v919 = vadd.f32 %v918, %v652
      %v920 = vadd.f32 %v919, %v655
      %v921 = vadd.f32 %v920, %v660
      %v922 = vadd.f32 %v921, %v663
      %v923 = vadd.f32 %v922, %v668
      %v924 = vadd.f32 %v923, %v671
      %v925 = vadd.f32 %v924, %v676
      %v926 = vadd.f32 %v925, %v679
      %v927 = vadd.f32 %v926, %v684
      %v928 = vadd.f32 %v927, %v687
      %v929 = vadd.f32 %v928, %v692
      %v930 = vadd.f32 %v929, %v695
      %v931 = vadd.f32 %v930, %v700
      %v932 = vadd.f32 %v931, %v703
      %v933 = vadd.f32 %v932, %v708
      %v934 = vadd.f32 %v933, %v711
      %v935 = vadd.f32 %v934, %v716
      %v936 = vadd.f32 %v935, %v719
      %v937 = vadd.f32 %v936, %v724
      %v938 = vadd.f32 %v937, %v727
      %v939 = vadd.f32 %v938, %v732
      %v940 = vadd.f32 %v939, %v735
      %v941 = vadd.f32 %v940, %v740
      %v942 = vadd.f32 %v941, %v743
      %v943 = vadd.f32 %v942, %v748
      %v944 = vadd.f32 %v943, %v751
      %v945 = vrot.slane %v944, 4
      %v946 = vadd.f32 %v944, %v945
      %v947 = vrot.slane %v946, 2
      %v948 = vadd.f32 %v946, %v947
      %v949 = vrot.slane %v948, 1
      %v950 = vadd.f32 %v948, %v949
      %v951 = vmul.f32 %v628, %v628
      %v952 = vmul.f32 %v631, %v631
      %v953 = vmul.f32 %v636, %v636
      %v954 = vmul.f32 %v639, %v639
      %v955 = vmul.f32 %v644, %v644
      %v956 = vmul.f32 %v647, %v647
      %v957 = vmul.f32 %v652, %v652
      %v958 = vmul.f32 %v655, %v655
      %v959 = vmul.f32 %v660, %v660
      %v960 = vmul.f32 %v663, %v663
      %v961 = vmul.f32 %v668, %v668
      %v962 = vmul.f32 %v671, %v671
      %v963 = vmul.f32 %v676, %v676
      %v964 = vmul.f32 %v679, %v679
      %v965 = vmul.f32 %v684, %v684
      %v966 = vmul.f32 %v687, %v687
      %v967 = vmul.f32 %v692, %v692
      %v968 = vmul.f32 %v695, %v695
      %v969 = vmul.f32 %v700, %v700
      %v970 = vmul.f32 %v703, %v703
      %v971 = vmul.f32 %v708, %v708
      %v972 = vmul.f32 %v711, %v711
      %v973 = vmul.f32 %v716, %v716
      %v974 = vmul.f32 %v719, %v719
      %v975 = vmul.f32 %v724, %v724
      %v976 = vmul.f32 %v727, %v727
      %v977 = vmul.f32 %v732, %v732
      %v978 = vmul.f32 %v735, %v735
      %v979 = vmul.f32 %v740, %v740
      %v980 = vmul.f32 %v743, %v743
      %v981 = vmul.f32 %v748, %v748
      %v982 = vmul.f32 %v751, %v751
      %v983 = vadd.f32 %v951, %v952
      %v984 = vadd.f32 %v983, %v953
      %v985 = vadd.f32 %v984, %v954
      %v986 = vadd.f32 %v985, %v955
      %v987 = vadd.f32 %v986, %v956
      %v988 = vadd.f32 %v987, %v957
      %v989 = vadd.f32 %v988, %v958
      %v990 = vadd.f32 %v989, %v959
      %v991 = vadd.f32 %v990, %v960
      %v992 = vadd.f32 %v991, %v961
      %v993 = vadd.f32 %v992, %v962
      %v994 = vadd.f32 %v993, %v963
      %v995 = vadd.f32 %v994, %v964
      %v996 = vadd.f32 %v995, %v965
      %v997 = vadd.f32 %v996, %v966
      %v998 = vadd.f32 %v997, %v967
      %v999 = vadd.f32 %v998, %v968
      %v1000 = vadd.f32 %v999, %v969
      %v1001 = vadd.f32 %v1000, %v970
      %v1002 = vadd.f32 %v1001, %v971
      %v1003 = vadd.f32 %v1002, %v972
      %v1004 = vadd.f32 %v1003, %v973
      %v1005 = vadd.f32 %v1004, %v974
      %v1006 = vadd.f32 %v1005, %v975
      %v1007 = vadd.f32 %v1006, %v976
      %v1008 = vadd.f32 %v1007, %v977
      %v1009 = vadd.f32 %v1008, %v978
      %v1010 = vadd.f32 %v1009, %v979
      %v1011 = vadd.f32 %v1010, %v980
      %v1012 = vadd.f32 %v1011, %v981
      %v1013 = vadd.f32 %v1012, %v982
      %v1014 = vrot.slane %v1013, 4
      %v1015 = vadd.f32 %v1013, %v1014
      %v1016 = vrot.slane %v1015, 2
      %v1017 = vadd.f32 %v1015, %v1016
      %v1018 = vrot.slane %v1017, 1
      %v1019 = vadd.f32 %v1017, %v1018
      %vm1020 = vcmask 1040384
      %v1021 = vsel %vm1020, %v950, %v1019
      %1022 = vst [vmem:[%s271] sm:$0x3] %v1021
      %s1023 = smul.u32 32, %s20
      %p1024 = scmp.lt.s32.totalorder %s1023, 255
      %s1025 = scalar_select %p1024, %s1023, 255
      %p1026 = scmp.lt.s32.totalorder %s21, 0
      %s1027 = scalar_select %p1026, %s21, 0
      %s1028 = sadd.s32 %s1027, %s1025
      %s1029 = smul.addr %s1028, 4
      %s1030 = scalar_lea.vmem %s2, %s1029
      %p1031 = scmp.lt.s32.totalorder %s20, 7
      %s1032 = scalar_select %p1031, %s20, 7
      %p1033 = scmp.lt.s32.totalorder %s21, 0
      %s1034 = scalar_select %p1033, %s21, 0
      %s1035 = sadd.s32 %s1034, %s1032
      %s1036 = smul.addr %s1035, 2
      %s1037 = scalar_lea.vmem %s3, %s1036
      // Predicated region
      $region29: #{stem_fwd.2} parent=27 // pred_check
        %p1038 = pneg %p110
      $region30: #{stem_fwd.2} parent=27 // pred_check_branch
        %1040 = sbr.rel (%p1038) target = $region32
      $region31: #{stem_fwd.2} parent=27 // pred_region
        %s1041 = smul.u32 32, %s20
      $region32: #{stem_fwd.2} parent=27 // pred_fallthru
        _
      // Predicated region
      $region33: #{stem_fwd.2} parent=27 // pred_check
        %p1042 = pneg %p138
      $region34: #{stem_fwd.2} parent=27 // pred_check_branch
        %1044 = sbr.rel (%p1042) target = $region36
      $region35: #{stem_fwd.2} parent=27 // pred_region
        _
      $region36: #{stem_fwd.2} parent=27 // pred_fallthru
        _
    $region28: #{stem_fwd.2} parent=5 // pred_fallthru
      _
    %p1045 = scmp.le.s32.totalorder 2, %s10
    // Predicated region
    $region37: #{stem_fwd.2} parent=5 // pred_check
      %p1046 = pneg %p1045
    $region38: #{stem_fwd.2} parent=5 // pred_check_branch
      %1048 = sbr.rel (%p1046) target = $region40
    $region39: #{stem_fwd.2} parent=5 // pred_region
      %s1049 = ssub.s32 %s10, 2
      // Predicated region
      $region41: #{stem_fwd.2} parent=39 // pred_check
        %p1050 = pneg %p116
      $region42: #{stem_fwd.2} parent=39 // pred_check_branch
        %1052 = sbr.rel (%p1050) target = $region44
      $region43: #{stem_fwd.2} parent=39 // pred_region
        %s1053 = smul.u32 32, %s23
        %p1054 = scmp.lt.s32.totalorder %s1053, 255
        %s1055 = scalar_select %p1054, %s1053, 255
        %p1056 = scmp.lt.s32.totalorder %s24, 0
        %s1057 = scalar_select %p1056, %s24, 0
        %s1058 = sadd.s32 %s1057, %s1055
        %s1059 = smul.addr %s1058, 4
        %s1060 = scalar_lea.vmem %s2, %s1059
      $region44: #{stem_fwd.2} parent=39 // pred_fallthru
        _
      // Predicated region
      $region45: #{stem_fwd.2} parent=39 // pred_check
        %p1061 = pneg %p144
      $region46: #{stem_fwd.2} parent=39 // pred_check_branch
        %1063 = sbr.rel (%p1061) target = $region48
      $region47: #{stem_fwd.2} parent=39 // pred_region
        %p1064 = scmp.lt.s32.totalorder %s23, 7
        %s1065 = scalar_select %p1064, %s23, 7
        %p1066 = scmp.lt.s32.totalorder %s24, 0
        %s1067 = scalar_select %p1066, %s24, 0
        %s1068 = sadd.s32 %s1067, %s1065
        %s1069 = smul.addr %s1068, 2
        %s1070 = scalar_lea.vmem %s3, %s1069
      $region48: #{stem_fwd.2} parent=39 // pred_fallthru
        _
    $region40: #{stem_fwd.2} parent=5 // pred_fallthru
      _
  $region6: #{stem_fwd.2} parent=0 // loop_footer
    %s14 = sadd.s32 1, %s10
  $region7: #{stem_fwd.2} parent=0 // loop_footer_branch
    %9 = sbr.rel target = $region3
  $region8: #{stem_fwd.2} parent=0 // loop_exit
    _

</llo_original>
